<compile_context>
chip_gen: v7x
topology: tpu7x:2x2x1
jax: 0.10.0
libtpu: 0.0.40
codegen_flags: <defaults>
</compile_context>

<pallas_src>
import functools
import math

import jax
import jax.numpy as jnp
from jax.experimental import pallas as pl
from jax.experimental.pallas import tpu as pltpu


def _tensorcores_per_device() -> int:
    """2 for megacore-style parts (v4 / v7x), 1 for v5e / v6e single-TC parts."""
    try:
        kind = jax.devices()[0].device_kind.lower()
        return 2 if ("7" in kind or "v4" in kind) else 1
    except Exception:
        return 1


def mhsa_kernel(x_ref, w_ref, b_ref, o_ref, *,
                batch_block, seq_len, head_num, head_dim, fast_math):
    """One grid step == `batch_block` batch elements.

    x_ref : (batch_block*S, E)       activations (batch rows flattened)
    w_ref : (E, 2*H*Dh)              fused [Wq.T*scale | Wv.T] projection slab
    b_ref : (1, 2*H*Dh)              fused [bq*scale | bv] bias (f32)
    o_ref : (batch_block, S, H*Dh)   output already in the module's layout
    """
    bb, S, H, Dh = batch_block, seq_len, head_num, head_dim
    hd = H * Dh
    mm = jnp.bfloat16 if fast_math else jnp.float32

    x = x_ref[...]
    if fast_math:
        x = x.astype(mm)                 # w_ref is already bf16 from the wrapper
    # Single fused Q/V projection: MXU M = bb*S rows, N = 2*hidden lanes.
    qv = jnp.dot(x, w_ref[...], preferred_element_type=jnp.float32) + b_ref[...]

    # Rearrange to one head-major (G, S, Dh) batch (G = bb*H) so the scores and
    # P@V matmuls are each a single batched dot_general instead of 2*G tiny ones.
    q = jnp.stack([qv[b * S:(b + 1) * S, h * Dh:(h + 1) * Dh]
                   for b in range(bb) for h in range(H)], axis=0)
    v = jnp.stack([qv[b * S:(b + 1) * S, hd + h * Dh:hd + (h + 1) * Dh]
                   for b in range(bb) for h in range(H)], axis=0)
    q = q.astype(mm)                     # casts hoisted: once per operand
    v = v.astype(mm)

    # Reference module uses V (not K) in the scores matmul — kept as-is.
    s = jnp.einsum('gqd,gkd->gqk', q, v,
                   preferred_element_type=jnp.float32)           # (G, S, S) f32

    # Numerically-stable softmax, strictly in f32 (scale already folded into Q).
    s = s - jnp.max(s, axis=-1, keepdims=True)
    p = jnp.exp(s)
    p = p * pl.reciprocal(jnp.sum(p, axis=-1, keepdims=True), approx=fast_math)

    # TODO(synk): nn.Dropout on attention weights omitted (eval-mode identity).

    out = jnp.einsum('gqk,gkd->gqd', p.astype(mm), v,
                     preferred_element_type=jnp.float32)         # (G, S, Dh)

    # Store each (batch, head) tile straight into its lane strip of the output
    # block — no lane-axis concatenate before the store.
    # TODO(synk): a lane-dense (bb, S*hidden) out block would turn these into a
    # single unmasked vst at the cost of an in-kernel (H,Dh)->lane merge relayout.
    for b in range(bb):
        for h in range(H):
            o_ref[b, :, h * Dh:(h + 1) * Dh] = out[b * H + h].astype(o_ref.dtype)


def multi_head_self_attention(x, Wq, bq, Wv, bv, head_num, *,
                              fast_math=False, batch_block=None):
    """x: (B, S, E); Wq/Wv: (hidden, E) PyTorch (out, in) layout; bq/bv: (hidden,).

    Returns (B, S, hidden), matching the module's forward output.
    """
    B, S, E = x.shape
    hidden = Wq.shape[0]
    Dh = hidden // head_num
    scale = 1.0 / math.sqrt(Dh)

    # Fused projection slab with the 1/sqrt(Dh) scale folded into the Wq half
    # (free constant-weight fold); head h already lives in columns
    # [h*Dh:(h+1)*Dh] of each half, so no per-head reshuffle is needed.
    w_qv = jnp.concatenate([Wq.T * scale, Wv.T], axis=1)              # (E, 2*hidden)
    b_qv = jnp.concatenate([bq * scale, bv])[None, :].astype(jnp.float32)
    if fast_math:
        w_qv = w_qv.astype(jnp.bfloat16)   # halves the largest input DMA

    # Grid shape: one step on single-TC chips (v5e/v6e); one batch element per
    # TensorCore on megacore parts (v7x / v4).
    if batch_block is None:
        cores = _tensorcores_per_device()
        batch_block = B if cores == 1 else max(1, B // cores)
    if B % batch_block != 0:
        batch_block = 1
    num_steps = B // batch_block

    x2d = x.reshape(B * S, E)              # free row-major flatten

    flops = 2 * B * S * E * (2 * hidden) + 2 * (2 * B * head_num * S * S * Dh)
    transcendentals = B * head_num * S * S
    bytes_accessed = (x2d.size * x2d.dtype.itemsize
                      + w_qv.size * w_qv.dtype.itemsize
                      + b_qv.size * b_qv.dtype.itemsize
                      + B * S * hidden * x.dtype.itemsize)

    kernel = functools.partial(
        mhsa_kernel, batch_block=batch_block, seq_len=S,
        head_num=head_num, head_dim=Dh, fast_math=fast_math)

    return pl.pallas_call(
        kernel,
        out_shape=jax.ShapeDtypeStruct((B, S, hidden), x.dtype),
        grid=(num_steps,),
        in_specs=[
            pl.BlockSpec((batch_block * S, E), lambda i: (i, 0)),
            pl.BlockSpec((E, 2 * hidden), lambda i: (0, 0)),
            pl.BlockSpec((1, 2 * hidden), lambda i: (0, 0)),
        ],
        out_specs=pl.BlockSpec((batch_block, S, hidden), lambda i: (i, 0, 0)),
        compiler_params=pltpu.CompilerParams(
            dimension_semantics=("parallel",),   # feeds both TCs on megacore parts
        ),
        cost_estimate=pl.CostEstimate(
            flops=flops,
            transcendentals=transcendentals,
            bytes_accessed=bytes_accessed),
    )(x2d, w_qv, b_qv)


def reference(x, Wq, bq, Wv, bv, head_num):
    """Pure-JAX replica of the PyTorch forward (eval mode, no mask)."""
    B, S, E = x.shape
    hidden = Wq.shape[0]
    Dh = hidden // head_num
    Q = x @ Wq.T + bq
    V = x @ Wv.T + bv
    Q = Q.reshape(B, S, head_num, Dh).transpose(0, 2, 1, 3)
    V = V.reshape(B, S, head_num, Dh).transpose(0, 2, 1, 3)
    scores = jnp.einsum("bhqd,bhkd->bhqk", Q, V) / math.sqrt(Dh)
    attn = jax.nn.softmax(scores, axis=-1)
    out = jnp.einsum("bhqk,bhkd->bhqd", attn, V)
    return out.transpose(0, 2, 1, 3).reshape(B, S, hidden)


if __name__ == "__main__":
    batch, seq, embed_dim, hidden_dim, head_num = 2, 8, 32, 32, 4

    key = jax.random.PRNGKey(0)
    kx, kq, kbq, kk, kbk, kv, kbv = jax.random.split(key, 7)

    x = jax.random.normal(kx, (batch, seq, embed_dim), dtype=jnp.float32)

    # nn.Linear-style init: W (out, in), b (out,), uniform(+-1/sqrt(in)).
    bound = 1.0 / math.sqrt(embed_dim)
    Wq = jax.random.uniform(kq, (hidden_dim, embed_dim), jnp.float32, -bound, bound)
    bq = jax.random.uniform(kbq, (hidden_dim,), jnp.float32, -bound, bound)
    Wk = jax.random.uniform(kk, (hidden_dim, embed_dim), jnp.float32, -bound, bound)  # unused by forward math
    bk = jax.random.uniform(kbk, (hidden_dim,), jnp.float32, -bound, bound)           # unused by forward math
    Wv = jax.random.uniform(kv, (hidden_dim, embed_dim), jnp.float32, -bound, bound)
    bv = jax.random.uniform(kbv, (hidden_dim,), jnp.float32, -bound, bound)

    ref = reference(x, Wq, bq, Wv, bv, head_num)

    # Exact-precision f32 path.
    out = multi_head_self_attention(x, Wq, bq, Wv, bv, head_num, fast_math=False)
    out = jax.block_until_ready(out)
    assert out.shape == (batch, seq, hidden_dim)
    assert jnp.allclose(out, ref, atol=1e-5, rtol=1e-5), "f32 mismatch vs reference"

    # Fast-math path (bf16 MXU inputs for projection + attention, f32 accumulate,
    # f32 softmax, EUP approx reciprocal).  Intended for v6e/v7x; f32 path is the
    # faster choice on v5e.
    out_fast = multi_head_self_attention(x, Wq, bq, Wv, bv, head_num, fast_math=True)
    out_fast = jax.block_until_ready(out_fast)
    assert jnp.allclose(out_fast, ref, atol=5e-2, rtol=5e-2), "bf16 path mismatch"

    print("KERNEL_OK")
</pallas_src>

<mosaic_0001>
module attributes {stable_mosaic.version = 11 : i64} {
  func.func @mhsa_kernel(%arg0: i32, %arg1: memref<16x32xf32, #tpu.memory_space<vmem>>, %arg2: memref<32x64xf32, #tpu.memory_space<vmem>>, %arg3: memref<1x64xf32, #tpu.memory_space<vmem>>, %arg4: memref<2x8x32xf32, #tpu.memory_space<vmem>>) attributes {dimension_semantics = [#tpu.dimension_semantics<parallel>], iteration_bounds = array<i64: 1>, scalar_prefetch = 0 : i64, scratch_operands = 0 : i64, tpu.core_type = #tpu.core_type<tc>, window_params = [{transform_indices = @transform_0, window_bounds = array<i64: 16, 32>}, {pipeline_mode = #tpu.pipeline_mode<synchronous>, transform_indices = @transform_1, window_bounds = array<i64: 32, 64>}, {pipeline_mode = #tpu.pipeline_mode<synchronous>, transform_indices = @transform_2, window_bounds = array<i64: 1, 64>}, {transform_indices = @transform_3, window_bounds = array<i64: 2, 8, 32>}]} {
    %c0 = arith.constant 0 : index
    %c0_0 = arith.constant 0 : index
    %0 = vector.load %arg1[%c0, %c0_0] : memref<16x32xf32, #tpu.memory_space<vmem>>, vector<16x32xf32>
    %c0_1 = arith.constant 0 : index
    %c0_2 = arith.constant 0 : index
    %1 = vector.load %arg2[%c0_1, %c0_2] : memref<32x64xf32, #tpu.memory_space<vmem>>, vector<32x64xf32>
    %cst = arith.constant dense<0.000000e+00> : vector<16x64xf32>
    %2 = tpu.matmul %0, %1, %cst {dimension_numbers = #tpu.dot_dimension_numbers<[1], [0], [0], [1], [0, 0, 1, 1], [], []>} : vector<16x32xf32>, vector<32x64xf32>, vector<16x64xf32> -> vector<16x64xf32>
    %c0_3 = arith.constant 0 : index
    %c0_4 = arith.constant 0 : index
    %3 = vector.load %arg3[%c0_3, %c0_4] : memref<1x64xf32, #tpu.memory_space<vmem>>, vector<1x64xf32>
    %4 = vector.broadcast %3 : vector<1x64xf32> to vector<16x64xf32>
    %5 = arith.addf %2, %4 : vector<16x64xf32>
    %6 = vector.extract_strided_slice %5 {offsets = [0, 0], sizes = [8, 8], strides = [1, 1]} : vector<16x64xf32> to vector<8x8xf32>
    %7 = vector.extract_strided_slice %5 {offsets = [0, 8], sizes = [8, 8], strides = [1, 1]} : vector<16x64xf32> to vector<8x8xf32>
    %8 = vector.extract_strided_slice %5 {offsets = [0, 16], sizes = [8, 8], strides = [1, 1]} : vector<16x64xf32> to vector<8x8xf32>
    %9 = vector.extract_strided_slice %5 {offsets = [0, 24], sizes = [8, 8], strides = [1, 1]} : vector<16x64xf32> to vector<8x8xf32>
    %10 = vector.extract_strided_slice %5 {offsets = [8, 0], sizes = [8, 8], strides = [1, 1]} : vector<16x64xf32> to vector<8x8xf32>
    %11 = vector.extract_strided_slice %5 {offsets = [8, 8], sizes = [8, 8], strides = [1, 1]} : vector<16x64xf32> to vector<8x8xf32>
    %12 = vector.extract_strided_slice %5 {offsets = [8, 16], sizes = [8, 8], strides = [1, 1]} : vector<16x64xf32> to vector<8x8xf32>
    %13 = vector.extract_strided_slice %5 {offsets = [8, 24], sizes = [8, 8], strides = [1, 1]} : vector<16x64xf32> to vector<8x8xf32>
    %14 = vector.shape_cast %6 : vector<8x8xf32> to vector<1x8x8xf32>
    %15 = vector.shape_cast %7 : vector<8x8xf32> to vector<1x8x8xf32>
    %16 = vector.shape_cast %8 : vector<8x8xf32> to vector<1x8x8xf32>
    %17 = vector.shape_cast %9 : vector<8x8xf32> to vector<1x8x8xf32>
    %18 = vector.shape_cast %10 : vector<8x8xf32> to vector<1x8x8xf32>
    %19 = vector.shape_cast %11 : vector<8x8xf32> to vector<1x8x8xf32>
    %20 = vector.shape_cast %12 : vector<8x8xf32> to vector<1x8x8xf32>
    %21 = vector.shape_cast %13 : vector<8x8xf32> to vector<1x8x8xf32>
    %22 = tpu.concatenate %14, %15, %16, %17, %18, %19, %20, %21 in 0 : vector<1x8x8xf32>, vector<1x8x8xf32>, vector<1x8x8xf32>, vector<1x8x8xf32>, vector<1x8x8xf32>, vector<1x8x8xf32>, vector<1x8x8xf32>, vector<1x8x8xf32> -> vector<8x8x8xf32>
    %23 = vector.extract_strided_slice %5 {offsets = [0, 32], sizes = [8, 8], strides = [1, 1]} : vector<16x64xf32> to vector<8x8xf32>
    %24 = vector.extract_strided_slice %5 {offsets = [0, 40], sizes = [8, 8], strides = [1, 1]} : vector<16x64xf32> to vector<8x8xf32>
    %25 = vector.extract_strided_slice %5 {offsets = [0, 48], sizes = [8, 8], strides = [1, 1]} : vector<16x64xf32> to vector<8x8xf32>
    %26 = vector.extract_strided_slice %5 {offsets = [0, 56], sizes = [8, 8], strides = [1, 1]} : vector<16x64xf32> to vector<8x8xf32>
    %27 = vector.extract_strided_slice %5 {offsets = [8, 32], sizes = [8, 8], strides = [1, 1]} : vector<16x64xf32> to vector<8x8xf32>
    %28 = vector.extract_strided_slice %5 {offsets = [8, 40], sizes = [8, 8], strides = [1, 1]} : vector<16x64xf32> to vector<8x8xf32>
    %29 = vector.extract_strided_slice %5 {offsets = [8, 48], sizes = [8, 8], strides = [1, 1]} : vector<16x64xf32> to vector<8x8xf32>
    %30 = vector.extract_strided_slice %5 {offsets = [8, 56], sizes = [8, 8], strides = [1, 1]} : vector<16x64xf32> to vector<8x8xf32>
    %31 = vector.shape_cast %23 : vector<8x8xf32> to vector<1x8x8xf32>
    %32 = vector.shape_cast %24 : vector<8x8xf32> to vector<1x8x8xf32>
    %33 = vector.shape_cast %25 : vector<8x8xf32> to vector<1x8x8xf32>
    %34 = vector.shape_cast %26 : vector<8x8xf32> to vector<1x8x8xf32>
    %35 = vector.shape_cast %27 : vector<8x8xf32> to vector<1x8x8xf32>
    %36 = vector.shape_cast %28 : vector<8x8xf32> to vector<1x8x8xf32>
    %37 = vector.shape_cast %29 : vector<8x8xf32> to vector<1x8x8xf32>
    %38 = vector.shape_cast %30 : vector<8x8xf32> to vector<1x8x8xf32>
    %39 = tpu.concatenate %31, %32, %33, %34, %35, %36, %37, %38 in 0 : vector<1x8x8xf32>, vector<1x8x8xf32>, vector<1x8x8xf32>, vector<1x8x8xf32>, vector<1x8x8xf32>, vector<1x8x8xf32>, vector<1x8x8xf32>, vector<1x8x8xf32> -> vector<8x8x8xf32>
    "tpu.trace_start"() <{level = 10 : i32, message = "gqd,gkd->gqk"}> : () -> ()
    %cst_5 = arith.constant dense<0.000000e+00> : vector<8x8x8xf32>
    %40 = tpu.matmul %22, %39, %cst_5 {dimension_numbers = #tpu.dot_dimension_numbers<[2], [2], [1], [1], [0, 0, 0, 1, 1, 1], [0], [0]>} : vector<8x8x8xf32>, vector<8x8x8xf32>, vector<8x8x8xf32> -> vector<8x8x8xf32>
    "tpu.trace_stop"() : () -> ()
    %cst_6 = arith.constant dense<0xFF800000> : vector<8x8xf32>
    %41 = vector.multi_reduction <maximumf>, %40, %cst_6 [2] : vector<8x8x8xf32> to vector<8x8xf32>
    %42 = vector.shape_cast %41 : vector<8x8xf32> to vector<8x8x1xf32>
    %43 = vector.broadcast %42 : vector<8x8x1xf32> to vector<8x8x8xf32>
    %44 = arith.subf %40, %43 : vector<8x8x8xf32>
    %45 = math.exp %44 : vector<8x8x8xf32>
    %cst_7 = arith.constant dense<0.000000e+00> : vector<8x8xf32>
    %46 = vector.multi_reduction <add>, %45, %cst_7 [2] : vector<8x8x8xf32> to vector<8x8xf32>
    %47 = vector.shape_cast %46 : vector<8x8xf32> to vector<8x8x1xf32>
    %48 = tpu.reciprocal %47 : vector<8x8x1xf32> -> vector<8x8x1xf32>
    %49 = vector.broadcast %48 : vector<8x8x1xf32> to vector<8x8x8xf32>
    %50 = arith.mulf %45, %49 : vector<8x8x8xf32>
    "tpu.trace_start"() <{level = 10 : i32, message = "gqk,gkd->gqd"}> : () -> ()
    %cst_8 = arith.constant dense<0.000000e+00> : vector<8x8x8xf32>
    %51 = tpu.matmul %50, %39, %cst_8 {dimension_numbers = #tpu.dot_dimension_numbers<[2], [1], [1], [2], [0, 0, 0, 1, 1, 2], [0], [0]>} : vector<8x8x8xf32>, vector<8x8x8xf32>, vector<8x8x8xf32> -> vector<8x8x8xf32>
    "tpu.trace_stop"() : () -> ()
    %52 = vector.extract_strided_slice %51 {offsets = [0, 0, 0], sizes = [1, 8, 8], strides = [1, 1, 1]} : vector<8x8x8xf32> to vector<1x8x8xf32>
    %53 = vector.shape_cast %52 : vector<1x8x8xf32> to vector<8x8xf32>
    %c0_9 = arith.constant 0 : index
    %c0_10 = arith.constant 0 : index
    %c0_11 = arith.constant 0 : index
    %54 = vector.load %arg4[%c0_9, %c0_10, %c0_11] : memref<2x8x32xf32, #tpu.memory_space<vmem>>, vector<1x8x8xf32>
    %55 = vector.shape_cast %54 : vector<1x8x8xf32> to vector<8x8xf32>
    %56 = vector.shape_cast %53 : vector<8x8xf32> to vector<1x8x8xf32>
    tpu.vector_store %arg4[%c0_9, %c0_10, %c0_11], %56 {strides = array<i32>} : memref<2x8x32xf32, #tpu.memory_space<vmem>>, vector<1x8x8xf32>,
    %57 = vector.extract_strided_slice %51 {offsets = [1, 0, 0], sizes = [1, 8, 8], strides = [1, 1, 1]} : vector<8x8x8xf32> to vector<1x8x8xf32>
    %58 = vector.shape_cast %57 : vector<1x8x8xf32> to vector<8x8xf32>
    %c0_12 = arith.constant 0 : index
    %c0_13 = arith.constant 0 : index
    %c8 = arith.constant 8 : index
    %59 = vector.load %arg4[%c0_12, %c0_13, %c8] : memref<2x8x32xf32, #tpu.memory_space<vmem>>, vector<1x8x8xf32>
    %60 = vector.shape_cast %59 : vector<1x8x8xf32> to vector<8x8xf32>
    %61 = vector.shape_cast %58 : vector<8x8xf32> to vector<1x8x8xf32>
    tpu.vector_store %arg4[%c0_12, %c0_13, %c8], %61 {strides = array<i32>} : memref<2x8x32xf32, #tpu.memory_space<vmem>>, vector<1x8x8xf32>,
    %62 = vector.extract_strided_slice %51 {offsets = [2, 0, 0], sizes = [1, 8, 8], strides = [1, 1, 1]} : vector<8x8x8xf32> to vector<1x8x8xf32>
    %63 = vector.shape_cast %62 : vector<1x8x8xf32> to vector<8x8xf32>
    %c0_14 = arith.constant 0 : index
    %c0_15 = arith.constant 0 : index
    %c16 = arith.constant 16 : index
    %64 = vector.load %arg4[%c0_14, %c0_15, %c16] : memref<2x8x32xf32, #tpu.memory_space<vmem>>, vector<1x8x8xf32>
    %65 = vector.shape_cast %64 : vector<1x8x8xf32> to vector<8x8xf32>
    %66 = vector.shape_cast %63 : vector<8x8xf32> to vector<1x8x8xf32>
    tpu.vector_store %arg4[%c0_14, %c0_15, %c16], %66 {strides = array<i32>} : memref<2x8x32xf32, #tpu.memory_space<vmem>>, vector<1x8x8xf32>,
    %67 = vector.extract_strided_slice %51 {offsets = [3, 0, 0], sizes = [1, 8, 8], strides = [1, 1, 1]} : vector<8x8x8xf32> to vector<1x8x8xf32>
    %68 = vector.shape_cast %67 : vector<1x8x8xf32> to vector<8x8xf32>
    %c0_16 = arith.constant 0 : index
    %c0_17 = arith.constant 0 : index
    %c24 = arith.constant 24 : index
    %69 = vector.load %arg4[%c0_16, %c0_17, %c24] : memref<2x8x32xf32, #tpu.memory_space<vmem>>, vector<1x8x8xf32>
    %70 = vector.shape_cast %69 : vector<1x8x8xf32> to vector<8x8xf32>
    %71 = vector.shape_cast %68 : vector<8x8xf32> to vector<1x8x8xf32>
    tpu.vector_store %arg4[%c0_16, %c0_17, %c24], %71 {strides = array<i32>} : memref<2x8x32xf32, #tpu.memory_space<vmem>>, vector<1x8x8xf32>,
    %72 = vector.extract_strided_slice %51 {offsets = [4, 0, 0], sizes = [1, 8, 8], strides = [1, 1, 1]} : vector<8x8x8xf32> to vector<1x8x8xf32>
    %73 = vector.shape_cast %72 : vector<1x8x8xf32> to vector<8x8xf32>
    %c1 = arith.constant 1 : index
    %c0_18 = arith.constant 0 : index
    %c0_19 = arith.constant 0 : index
    %74 = vector.load %arg4[%c1, %c0_18, %c0_19] : memref<2x8x32xf32, #tpu.memory_space<vmem>>, vector<1x8x8xf32>
    %75 = vector.shape_cast %74 : vector<1x8x8xf32> to vector<8x8xf32>
    %76 = vector.shape_cast %73 : vector<8x8xf32> to vector<1x8x8xf32>
    tpu.vector_store %arg4[%c1, %c0_18, %c0_19], %76 {strides = array<i32>} : memref<2x8x32xf32, #tpu.memory_space<vmem>>, vector<1x8x8xf32>,
    %77 = vector.extract_strided_slice %51 {offsets = [5, 0, 0], sizes = [1, 8, 8], strides = [1, 1, 1]} : vector<8x8x8xf32> to vector<1x8x8xf32>
    %78 = vector.shape_cast %77 : vector<1x8x8xf32> to vector<8x8xf32>
    %c1_20 = arith.constant 1 : index
    %c0_21 = arith.constant 0 : index
    %c8_22 = arith.constant 8 : index
    %79 = vector.load %arg4[%c1_20, %c0_21, %c8_22] : memref<2x8x32xf32, #tpu.memory_space<vmem>>, vector<1x8x8xf32>
    %80 = vector.shape_cast %79 : vector<1x8x8xf32> to vector<8x8xf32>
    %81 = vector.shape_cast %78 : vector<8x8xf32> to vector<1x8x8xf32>
    tpu.vector_store %arg4[%c1_20, %c0_21, %c8_22], %81 {strides = array<i32>} : memref<2x8x32xf32, #tpu.memory_space<vmem>>, vector<1x8x8xf32>,
    %82 = vector.extract_strided_slice %51 {offsets = [6, 0, 0], sizes = [1, 8, 8], strides = [1, 1, 1]} : vector<8x8x8xf32> to vector<1x8x8xf32>
    %83 = vector.shape_cast %82 : vector<1x8x8xf32> to vector<8x8xf32>
    %c1_23 = arith.constant 1 : index
    %c0_24 = arith.constant 0 : index
    %c16_25 = arith.constant 16 : index
    %84 = vector.load %arg4[%c1_23, %c0_24, %c16_25] : memref<2x8x32xf32, #tpu.memory_space<vmem>>, vector<1x8x8xf32>
    %85 = vector.shape_cast %84 : vector<1x8x8xf32> to vector<8x8xf32>
    %86 = vector.shape_cast %83 : vector<8x8xf32> to vector<1x8x8xf32>
    tpu.vector_store %arg4[%c1_23, %c0_24, %c16_25], %86 {strides = array<i32>} : memref<2x8x32xf32, #tpu.memory_space<vmem>>, vector<1x8x8xf32>,
    %87 = vector.extract_strided_slice %51 {offsets = [7, 0, 0], sizes = [1, 8, 8], strides = [1, 1, 1]} : vector<8x8x8xf32> to vector<1x8x8xf32>
    %88 = vector.shape_cast %87 : vector<1x8x8xf32> to vector<8x8xf32>
    %c1_26 = arith.constant 1 : index
    %c0_27 = arith.constant 0 : index
    %c24_28 = arith.constant 24 : index
    %89 = vector.load %arg4[%c1_26, %c0_27, %c24_28] : memref<2x8x32xf32, #tpu.memory_space<vmem>>, vector<1x8x8xf32>
    %90 = vector.shape_cast %89 : vector<1x8x8xf32> to vector<8x8xf32>
    %91 = vector.shape_cast %88 : vector<8x8xf32> to vector<1x8x8xf32>
    tpu.vector_store %arg4[%c1_26, %c0_27, %c24_28], %91 {strides = array<i32>} : memref<2x8x32xf32, #tpu.memory_space<vmem>>, vector<1x8x8xf32>,
    return
  }
  func.func @transform_0(%arg0: i32) -> (i32, i32) {
    %c0_i32 = arith.constant 0 : i32
    %c0_i32_0 = arith.constant 0 : i32
    return %arg0, %c0_i32 : i32, i32
  }
  func.func @transform_1(%arg0: i32) -> (i32, i32) {
    %c0_i32 = arith.constant 0 : i32
    %c0_i32_0 = arith.constant 0 : i32
    %c0_i32_1 = arith.constant 0 : i32
    return %c0_i32, %c0_i32_0 : i32, i32
  }
  func.func @transform_2(%arg0: i32) -> (i32, i32) {
    %c0_i32 = arith.constant 0 : i32
    %c0_i32_0 = arith.constant 0 : i32
    %c0_i32_1 = arith.constant 0 : i32
    return %c0_i32, %c0_i32_0 : i32, i32
  }
  func.func @transform_3(%arg0: i32) -> (i32, i32, i32) {
    %c0_i32 = arith.constant 0 : i32
    %c0_i32_0 = arith.constant 0 : i32
    %c0_i32_1 = arith.constant 0 : i32
    return %arg0, %c0_i32, %c0_i32_0 : i32, i32, i32
  }
}

</mosaic_0001>

<llo_original>
// kernel: tpu_custom_call.1
$region0: #{tpu_custom_call.1}
  #allocation0 [shape = 'u32[]', space=smem, size = 0x4, offset = 0x4, fixed_abs, tag = 'smem constant byte address 0x4 - core index']
  #allocation1 [shape = 'u32[144,128]{1,0:T(1,128)}', space=vmem, size = 0x12000, scoped, tag = 'internal scratch']
  %s0 = inlined_call_operand.hbm [shape: f32[16,32], index: 0, kind: input, shape index: {}]
  %s1 = inlined_call_operand.hbm [shape: f32[32,64], index: 1, kind: input, shape index: {}]
  %s2 = inlined_call_operand.vmem [shape: f32[1,64], index: 2, kind: input, shape index: {}]
  %s3 = inlined_call_operand.hbm [shape: f32[2,8,32], index: 3, kind: output, shape index: {}]
  %s4 = sld [smem:[#allocation0]]
  $region30: #{tpu_custom_call.1} parent=0
    _
  %s6 = ssub.s32 1, %s4
  %s7 = scalar_select 0, %s6, %s4
  $region1: #{tpu_custom_call.1} parent=0
    #allocation2 [shape = 'u8[8192]{0}', space=vmem, size = 0x2000, scoped, tag = 'input window, operand 0, single buffered']
    #allocation3 [shape = 's32[1]{0}', space=sflag, size = 0x4, scoped, tag = 'scoped memory for tpu_custom_call.1']
    #allocation4 [shape = 's32[1]{0}', space=sflag, size = 0x4, scoped, tag = 'scoped memory for tpu_custom_call.1']
    #allocation5 [shape = 'u8[16384]{0}', space=vmem, size = 0x4000, scoped, tag = 'input window, operand 1, single buffered']
    #allocation6 [shape = 's32[1]{0}', space=sflag, size = 0x4, scoped, tag = 'scoped memory for tpu_custom_call.1']
    #allocation7 [shape = 'u8[8192]{0}', space=vmem, size = 0x2000, scoped, tag = 'output window, operand 0, single buffered']
    %8 = vsyncpa [#allocation3], 0
    %9 = vsyncpa [#allocation6], 0
    %10 = vsyncpa [#allocation4], 0
    // Predicated region
    $region2: #{tpu_custom_call.1} parent=1 // pred_check
      _
    $region3: #{tpu_custom_call.1} parent=1 // pred_check_branch
      %12 = sbr.rel (0) target = $region5
    $region4: #{tpu_custom_call.1} parent=1 // pred_region
      %s14 = ssub.s32 256, 256
      %15 = vsyncadd [#allocation3], %s14
      %s16 = sshll.u32 [#allocation2], 4
      %s17 = int_to_ptr.vmem [resolvable:$true] %s16
      %22 = dma.hbm_to_vmem [thread:$0]  %s0, 256, %s17, [#allocation3], 128, 128, 8
    $region5: #{tpu_custom_call.1} parent=1 // pred_fallthru
      _
    // Predicated region
    $region6: #{tpu_custom_call.1} parent=1 // pred_check
      _
    $region7: #{tpu_custom_call.1} parent=1 // pred_check_branch
      %24 = sbr.rel (0) target = $region9
    $region8: #{tpu_custom_call.1} parent=1 // pred_region
      %s26 = ssub.s32 512, 512
      %27 = vsyncadd [#allocation6], %s26
      %s28 = sshll.u32 [#allocation5], 4
      %s29 = int_to_ptr.vmem [resolvable:$true] %s28
      %34 = dma.hbm_to_vmem [thread:$0]  %s1, 512, %s29, [#allocation6], 128, 128, 8
    $region9: #{tpu_custom_call.1} parent=1 // pred_fallthru
      _
    // Predicated region
    $region10: #{tpu_custom_call.1} parent=1 // pred_check
      _
    $region11: #{tpu_custom_call.1} parent=1 // pred_check_branch
      %36 = sbr.rel (0) target = $region13
    $region12: #{tpu_custom_call.1} parent=1 // pred_region
      _
    $region13: #{tpu_custom_call.1} parent=1 // pred_fallthru
      _
    // Predicated region
    $region14: #{tpu_custom_call.1} parent=1 // pred_check
      _
    $region15: #{tpu_custom_call.1} parent=1 // pred_check_branch
      %38 = sbr.rel (0) target = $region17
    $region16: #{tpu_custom_call.1} parent=1 // pred_region
      %39 = dma.done [#allocation3], 256
    $region17: #{tpu_custom_call.1} parent=1 // pred_fallthru
      _
    // Predicated region
    $region18: #{tpu_custom_call.1} parent=1 // pred_check
      _
    $region19: #{tpu_custom_call.1} parent=1 // pred_check_branch
      %41 = sbr.rel (0) target = $region21
    $region20: #{tpu_custom_call.1} parent=1 // pred_region
      %42 = dma.done [#allocation6], 512
    $region21: #{tpu_custom_call.1} parent=1 // pred_fallthru
      _
    %v43 = vld [vmem:[#allocation2] sm:$0xff]
    %v44 = vld [vmem:[#allocation2 + $0x8] sm:$0xff]
    %v45 = vld [vmem:[#allocation5] sm:$0xff]
    %v46 = vld [vmem:[#allocation5 + $0x8] sm:$0xff]
    %v47 = vld [vmem:[#allocation5 + $0x10] sm:$0xff]
    %v48 = vld [vmem:[#allocation5 + $0x18] sm:$0xff]
    %v49 = vld [vmem:[%s2] sm:$0x1]
    %v51 = vlaneseq
    %v52 = vshrl.u32 %v51, 7
    %v53 = vsub.s32 0, %v52
    %v54 = vrot.slane %v49, %v53
    %vm56 = vcmask 261120
    %v58 = vsel %vm56, %v43, 0
    %v61 = vsel %vm56, %v44, 0
    %63 = vmatprep.subr.mxu0 0.0
    %64 = vmatpush1.msra.mxu0 %v45
    %65 = vmatprep.subr.mxu0 0.0
    %66 = vmatpush1.msra.mxu0 %v46
    %67 = vmatprep.subr.mxu0 0.0
    %68 = vmatpush1.msra.mxu0 %v47
    %69 = vmatprep.subr.mxu0 0.0
    %70 = vmatpush1.msra.mxu0 %v48
    %71 = vmatprep.subr.mxu0 0.0
    %72 = vmatpush1.msra.mxu0 0.0
    %73 = vmatprep.subr.mxu0 0.0
    %74 = vmatpush1.msra.mxu0 0.0
    %75 = vmatprep.subr.mxu0 0.0
    %76 = vmatpush1.msra.mxu0 0.0
    %77 = vmatprep.subr.mxu0 0.0
    %78 = vmatpush1.msra.mxu0 0.0
    %79 = vmatprep.subr.mxu0 0.0
    %80 = vmatpush1.msra.mxu0 0.0
    %81 = vmatprep.subr.mxu0 0.0
    %82 = vmatpush1.msra.mxu0 0.0
    %83 = vmatprep.subr.mxu0 0.0
    %84 = vmatpush1.msra.mxu0 0.0
    %85 = vmatprep.subr.mxu0 0.0
    %86 = vmatpush1.msra.mxu0 0.0
    %87 = vmatprep.subr.mxu0 0.0
    %88 = vmatpush1.msra.mxu0 0.0
    %89 = vmatprep.subr.mxu0 0.0
    %90 = vmatpush1.msra.mxu0 0.0
    %91 = vmatprep.subr.mxu0 0.0
    %92 = vmatpush1.msra.mxu0 0.0
    %93 = vmatprep.subr.mxu0 0.0
    %94 = vmatpush1.msra.mxu0 0.0
    %95 = vmatprep.subr.mxu0 0.0
    %96 = vmatpush1.msra.mxu0 0.0
    %97 = vmatprep.subr.mxu0 0.0
    %98 = vmatpush1.msra.mxu0 0.0
    %99 = vmatprep.subr.mxu0 0.0
    %100 = vmatpush1.msra.mxu0 0.0
    %101 = vmatprep.subr.mxu0 0.0
    %102 = vmatpush1.msra.mxu0 0.0
    %103 = vmatprep.subr.mxu0 0.0
    %104 = vmatpush1.msra.mxu0 0.0
    %105 = vmatprep.subr.mxu0 0.0
    %106 = vmatpush1.msra.mxu0 0.0
    %107 = vmatprep.subr.mxu0 0.0
    %108 = vmatpush1.msra.mxu0 0.0
    %109 = vmatprep.subr.mxu0 0.0
    %110 = vmatpush1.msra.mxu0 0.0
    %111 = vmatprep.subr.mxu0 0.0
    %112 = vmatpush1.msra.mxu0 0.0
    %113 = vmatprep.subr.mxu0 0.0
    %114 = vmatpush1.msra.mxu0 0.0
    %115 = vmatprep.subr.mxu0 0.0
    %116 = vmatpush1.msra.mxu0 0.0
    %117 = vmatprep.subr.mxu0 0.0
    %118 = vmatpush1.msra.mxu0 0.0
    %119 = vmatprep.subr.mxu0 0.0
    %120 = vmatpush1.msra.mxu0 0.0
    %121 = vmatprep.subr.mxu0 0.0
    %122 = vmatpush1.msra.mxu0 0.0
    %123 = vmatprep.subr.mxu0 0.0
    %124 = vmatpush1.msra.mxu0 0.0
    %125 = vmatprep.subr.mxu0 0.0
    %126 = vmatpush1.msra.mxu0 0.0
    %127 = vmatprep.mubr.f32.mxu0 0.0
    %128 = vmatmul.mubr.f32.gmra.mrb[0].mxu0 %v58
    %v129 = vpop.f32.mrb[0].mxu0
    %v130 = vadd.f32 %v54, %v129
    %v131 = vpop.f32.mrb[0].mxu0
    %132 = vmatprep.mubr.f32.mxu0 0.0
    %133 = vmatmul.mubr.f32.gmra.mrb[0].mxu0 %v61
    %v134 = vpop.f32.mrb[0].mxu0
    %v135 = vadd.f32 %v54, %v134
    %v136 = vpop.f32.mrb[0].mxu0
    %137 = vdwg.mxu0
    %139 = vrot.lane.b32.xlu0 %v130, 120
    %v140 = vpop.permute.xlu0 %139
    %141 = vrot.lane.b32.xlu0 %v130, 112
    %v142 = vpop.permute.xlu0 %141
    %143 = vrot.lane.b32.xlu0 %v130, 104
    %v144 = vpop.permute.xlu0 %143
    %146 = vrot.lane.b32.xlu0 %v135, 120
    %v147 = vpop.permute.xlu0 %146
    %148 = vrot.lane.b32.xlu0 %v135, 112
    %v149 = vpop.permute.xlu0 %148
    %150 = vrot.lane.b32.xlu0 %v135, 104
    %v151 = vpop.permute.xlu0 %150
    %152 = vrot.lane.b32.xlu0 %v130, 96
    %v153 = vpop.permute.xlu0 %152
    %vm154 = vcmask 64512
    %v155 = vsel %vm154, %v130, 0
    %v157 = vsel %vm154, %v153, 0
    %159 = vmatprep.subr.mxu0 0.0
    %160 = vmatpush1.xpose.msra.mxu0 %v157
    %161 = vmatprep.subr.mxu0 0.0
    %162 = vmatpush1.xpose.msra.mxu0 0.0
    %163 = vmatprep.subr.mxu0 0.0
    %164 = vmatpush1.xpose.msra.mxu0 0.0
    %165 = vmatprep.subr.mxu0 0.0
    %166 = vmatpush1.xpose.msra.mxu0 0.0
    %167 = vmatprep.subr.mxu0 0.0
    %168 = vmatpush1.xpose.msra.mxu0 0.0
    %169 = vmatprep.subr.mxu0 0.0
    %170 = vmatpush1.xpose.msra.mxu0 0.0
    %171 = vmatprep.subr.mxu0 0.0
    %172 = vmatpush1.xpose.msra.mxu0 0.0
    %173 = vmatprep.subr.mxu0 0.0
    %174 = vmatpush1.xpose.msra.mxu0 0.0
    %175 = vmatprep.subr.mxu0 0.0
    %176 = vmatpush1.xpose.msra.mxu0 0.0
    %177 = vmatprep.subr.mxu0 0.0
    %178 = vmatpush1.xpose.msra.mxu0 0.0
    %179 = vmatprep.subr.mxu0 0.0
    %180 = vmatpush1.xpose.msra.mxu0 0.0
    %181 = vmatprep.subr.mxu0 0.0
    %182 = vmatpush1.xpose.msra.mxu0 0.0
    %183 = vmatprep.subr.mxu0 0.0
    %184 = vmatpush1.xpose.msra.mxu0 0.0
    %185 = vmatprep.subr.mxu0 0.0
    %186 = vmatpush1.xpose.msra.mxu0 0.0
    %187 = vmatprep.subr.mxu0 0.0
    %188 = vmatpush1.xpose.msra.mxu0 0.0
    %189 = vmatprep.subr.mxu0 0.0
    %190 = vmatpush1.xpose.msra.mxu0 0.0
    %191 = vmatprep.subr.mxu0 0.0
    %192 = vmatpush1.xpose.msra.mxu0 0.0
    %193 = vmatprep.subr.mxu0 0.0
    %194 = vmatpush1.xpose.msra.mxu0 0.0
    %195 = vmatprep.subr.mxu0 0.0
    %196 = vmatpush1.xpose.msra.mxu0 0.0
    %197 = vmatprep.subr.mxu0 0.0
    %198 = vmatpush1.xpose.msra.mxu0 0.0
    %199 = vmatprep.subr.mxu0 0.0
    %200 = vmatpush1.xpose.msra.mxu0 0.0
    %201 = vmatprep.subr.mxu0 0.0
    %202 = vmatpush1.xpose.msra.mxu0 0.0
    %203 = vmatprep.subr.mxu0 0.0
    %204 = vmatpush1.xpose.msra.mxu0 0.0
    %205 = vmatprep.subr.mxu0 0.0
    %206 = vmatpush1.xpose.msra.mxu0 0.0
    %207 = vmatprep.subr.mxu0 0.0
    %208 = vmatpush1.xpose.msra.mxu0 0.0
    %209 = vmatprep.subr.mxu0 0.0
    %210 = vmatpush1.xpose.msra.mxu0 0.0
    %211 = vmatprep.subr.mxu0 0.0
    %212 = vmatpush1.xpose.msra.mxu0 0.0
    %213 = vmatprep.subr.mxu0 0.0
    %214 = vmatpush1.xpose.msra.mxu0 0.0
    %215 = vmatprep.subr.mxu0 0.0
    %216 = vmatpush1.xpose.msra.mxu0 0.0
    %217 = vmatprep.subr.mxu0 0.0
    %218 = vmatpush1.xpose.msra.mxu0 0.0
    %219 = vmatprep.subr.mxu0 0.0
    %220 = vmatpush1.xpose.msra.mxu0 0.0
    %221 = vmatprep.subr.mxu0 0.0
    %222 = vmatpush1.xpose.msra.mxu0 0.0
    %223 = vmatprep.mubr.f32.mxu0 0.0
    %224 = vmatmul.mubr.f32.gmra.mrb[0].mxu0 %v155
    %v225 = vpop.f32.mrb[0].mxu0
    %v226 = vadd.f32 0.0, %v225
    %v227 = vpop.f32.mrb[0].mxu0
    %228 = vdwg.mxu0
    %229 = vrot.lane.b32.xlu0 %v140, 96
    %v230 = vpop.permute.xlu0 %229
    %v231 = vsel %vm154, %v140, 0
    %v233 = vsel %vm154, %v230, 0
    %235 = vmatprep.subr.mxu0 0.0
    %236 = vmatpush1.xpose.msra.mxu0 %v233
    %237 = vmatprep.subr.mxu0 0.0
    %238 = vmatpush1.xpose.msra.mxu0 0.0
    %239 = vmatprep.subr.mxu0 0.0
    %240 = vmatpush1.xpose.msra.mxu0 0.0
    %241 = vmatprep.subr.mxu0 0.0
    %242 = vmatpush1.xpose.msra.mxu0 0.0
    %243 = vmatprep.subr.mxu0 0.0
    %244 = vmatpush1.xpose.msra.mxu0 0.0
    %245 = vmatprep.subr.mxu0 0.0
    %246 = vmatpush1.xpose.msra.mxu0 0.0
    %247 = vmatprep.subr.mxu0 0.0
    %248 = vmatpush1.xpose.msra.mxu0 0.0
    %249 = vmatprep.subr.mxu0 0.0
    %250 = vmatpush1.xpose.msra.mxu0 0.0
    %251 = vmatprep.subr.mxu0 0.0
    %252 = vmatpush1.xpose.msra.mxu0 0.0
    %253 = vmatprep.subr.mxu0 0.0
    %254 = vmatpush1.xpose.msra.mxu0 0.0
    %255 = vmatprep.subr.mxu0 0.0
    %256 = vmatpush1.xpose.msra.mxu0 0.0
    %257 = vmatprep.subr.mxu0 0.0
    %258 = vmatpush1.xpose.msra.mxu0 0.0
    %259 = vmatprep.subr.mxu0 0.0
    %260 = vmatpush1.xpose.msra.mxu0 0.0
    %261 = vmatprep.subr.mxu0 0.0
    %262 = vmatpush1.xpose.msra.mxu0 0.0
    %263 = vmatprep.subr.mxu0 0.0
    %264 = vmatpush1.xpose.msra.mxu0 0.0
    %265 = vmatprep.subr.mxu0 0.0
    %266 = vmatpush1.xpose.msra.mxu0 0.0
    %267 = vmatprep.subr.mxu0 0.0
    %268 = vmatpush1.xpose.msra.mxu0 0.0
    %269 = vmatprep.subr.mxu0 0.0
    %270 = vmatpush1.xpose.msra.mxu0 0.0
    %271 = vmatprep.subr.mxu0 0.0
    %272 = vmatpush1.xpose.msra.mxu0 0.0
    %273 = vmatprep.subr.mxu0 0.0
    %274 = vmatpush1.xpose.msra.mxu0 0.0
    %275 = vmatprep.subr.mxu0 0.0
    %276 = vmatpush1.xpose.msra.mxu0 0.0
    %277 = vmatprep.subr.mxu0 0.0
    %278 = vmatpush1.xpose.msra.mxu0 0.0
    %279 = vmatprep.subr.mxu0 0.0
    %280 = vmatpush1.xpose.msra.mxu0 0.0
    %281 = vmatprep.subr.mxu0 0.0
    %282 = vmatpush1.xpose.msra.mxu0 0.0
    %283 = vmatprep.subr.mxu0 0.0
    %284 = vmatpush1.xpose.msra.mxu0 0.0
    %285 = vmatprep.subr.mxu0 0.0
    %286 = vmatpush1.xpose.msra.mxu0 0.0
    %287 = vmatprep.subr.mxu0 0.0
    %288 = vmatpush1.xpose.msra.mxu0 0.0
    %289 = vmatprep.subr.mxu0 0.0
    %290 = vmatpush1.xpose.msra.mxu0 0.0
    %291 = vmatprep.subr.mxu0 0.0
    %292 = vmatpush1.xpose.msra.mxu0 0.0
    %293 = vmatprep.subr.mxu0 0.0
    %294 = vmatpush1.xpose.msra.mxu0 0.0
    %295 = vmatprep.subr.mxu0 0.0
    %296 = vmatpush1.xpose.msra.mxu0 0.0
    %297 = vmatprep.subr.mxu0 0.0
    %298 = vmatpush1.xpose.msra.mxu0 0.0
    %299 = vmatprep.mubr.f32.mxu0 0.0
    %300 = vmatmul.mubr.f32.gmra.mrb[0].mxu0 %v231
    %v301 = vpop.f32.mrb[0].mxu0
    %v302 = vadd.f32 0.0, %v301
    %v303 = vpop.f32.mrb[0].mxu0
    %304 = vdwg.mxu0
    %305 = vrot.lane.b32.xlu0 %v142, 96
    %v306 = vpop.permute.xlu0 %305
    %v307 = vsel %vm154, %v142, 0
    %v309 = vsel %vm154, %v306, 0
    %311 = vmatprep.subr.mxu0 0.0
    %312 = vmatpush1.xpose.msra.mxu0 %v309
    %313 = vmatprep.subr.mxu0 0.0
    %314 = vmatpush1.xpose.msra.mxu0 0.0
    %315 = vmatprep.subr.mxu0 0.0
    %316 = vmatpush1.xpose.msra.mxu0 0.0
    %317 = vmatprep.subr.mxu0 0.0
    %318 = vmatpush1.xpose.msra.mxu0 0.0
    %319 = vmatprep.subr.mxu0 0.0
    %320 = vmatpush1.xpose.msra.mxu0 0.0
    %321 = vmatprep.subr.mxu0 0.0
    %322 = vmatpush1.xpose.msra.mxu0 0.0
    %323 = vmatprep.subr.mxu0 0.0
    %324 = vmatpush1.xpose.msra.mxu0 0.0
    %325 = vmatprep.subr.mxu0 0.0
    %326 = vmatpush1.xpose.msra.mxu0 0.0
    %327 = vmatprep.subr.mxu0 0.0
    %328 = vmatpush1.xpose.msra.mxu0 0.0
    %329 = vmatprep.subr.mxu0 0.0
    %330 = vmatpush1.xpose.msra.mxu0 0.0
    %331 = vmatprep.subr.mxu0 0.0
    %332 = vmatpush1.xpose.msra.mxu0 0.0
    %333 = vmatprep.subr.mxu0 0.0
    %334 = vmatpush1.xpose.msra.mxu0 0.0
    %335 = vmatprep.subr.mxu0 0.0
    %336 = vmatpush1.xpose.msra.mxu0 0.0
    %337 = vmatprep.subr.mxu0 0.0
    %338 = vmatpush1.xpose.msra.mxu0 0.0
    %339 = vmatprep.subr.mxu0 0.0
    %340 = vmatpush1.xpose.msra.mxu0 0.0
    %341 = vmatprep.subr.mxu0 0.0
    %342 = vmatpush1.xpose.msra.mxu0 0.0
    %343 = vmatprep.subr.mxu0 0.0
    %344 = vmatpush1.xpose.msra.mxu0 0.0
    %345 = vmatprep.subr.mxu0 0.0
    %346 = vmatpush1.xpose.msra.mxu0 0.0
    %347 = vmatprep.subr.mxu0 0.0
    %348 = vmatpush1.xpose.msra.mxu0 0.0
    %349 = vmatprep.subr.mxu0 0.0
    %350 = vmatpush1.xpose.msra.mxu0 0.0
    %351 = vmatprep.subr.mxu0 0.0
    %352 = vmatpush1.xpose.msra.mxu0 0.0
    %353 = vmatprep.subr.mxu0 0.0
    %354 = vmatpush1.xpose.msra.mxu0 0.0
    %355 = vmatprep.subr.mxu0 0.0
    %356 = vmatpush1.xpose.msra.mxu0 0.0
    %357 = vmatprep.subr.mxu0 0.0
    %358 = vmatpush1.xpose.msra.mxu0 0.0
    %359 = vmatprep.subr.mxu0 0.0
    %360 = vmatpush1.xpose.msra.mxu0 0.0
    %361 = vmatprep.subr.mxu0 0.0
    %362 = vmatpush1.xpose.msra.mxu0 0.0
    %363 = vmatprep.subr.mxu0 0.0
    %364 = vmatpush1.xpose.msra.mxu0 0.0
    %365 = vmatprep.subr.mxu0 0.0
    %366 = vmatpush1.xpose.msra.mxu0 0.0
    %367 = vmatprep.subr.mxu0 0.0
    %368 = vmatpush1.xpose.msra.mxu0 0.0
    %369 = vmatprep.subr.mxu0 0.0
    %370 = vmatpush1.xpose.msra.mxu0 0.0
    %371 = vmatprep.subr.mxu0 0.0
    %372 = vmatpush1.xpose.msra.mxu0 0.0
    %373 = vmatprep.subr.mxu0 0.0
    %374 = vmatpush1.xpose.msra.mxu0 0.0
    %375 = vmatprep.mubr.f32.mxu0 0.0
    %376 = vmatmul.mubr.f32.gmra.mrb[0].mxu0 %v307
    %v377 = vpop.f32.mrb[0].mxu0
    %v378 = vadd.f32 0.0, %v377
    %v379 = vpop.f32.mrb[0].mxu0
    %380 = vdwg.mxu0
    %381 = vrot.lane.b32.xlu0 %v144, 96
    %v382 = vpop.permute.xlu0 %381
    %v383 = vsel %vm154, %v144, 0
    %v385 = vsel %vm154, %v382, 0
    %387 = vmatprep.subr.mxu0 0.0
    %388 = vmatpush1.xpose.msra.mxu0 %v385
    %389 = vmatprep.subr.mxu0 0.0
    %390 = vmatpush1.xpose.msra.mxu0 0.0
    %391 = vmatprep.subr.mxu0 0.0
    %392 = vmatpush1.xpose.msra.mxu0 0.0
    %393 = vmatprep.subr.mxu0 0.0
    %394 = vmatpush1.xpose.msra.mxu0 0.0
    %395 = vmatprep.subr.mxu0 0.0
    %396 = vmatpush1.xpose.msra.mxu0 0.0
    %397 = vmatprep.subr.mxu0 0.0
    %398 = vmatpush1.xpose.msra.mxu0 0.0
    %399 = vmatprep.subr.mxu0 0.0
    %400 = vmatpush1.xpose.msra.mxu0 0.0
    %401 = vmatprep.subr.mxu0 0.0
    %402 = vmatpush1.xpose.msra.mxu0 0.0
    %403 = vmatprep.subr.mxu0 0.0
    %404 = vmatpush1.xpose.msra.mxu0 0.0
    %405 = vmatprep.subr.mxu0 0.0
    %406 = vmatpush1.xpose.msra.mxu0 0.0
    %407 = vmatprep.subr.mxu0 0.0
    %408 = vmatpush1.xpose.msra.mxu0 0.0
    %409 = vmatprep.subr.mxu0 0.0
    %410 = vmatpush1.xpose.msra.mxu0 0.0
    %411 = vmatprep.subr.mxu0 0.0
    %412 = vmatpush1.xpose.msra.mxu0 0.0
    %413 = vmatprep.subr.mxu0 0.0
    %414 = vmatpush1.xpose.msra.mxu0 0.0
    %415 = vmatprep.subr.mxu0 0.0
    %416 = vmatpush1.xpose.msra.mxu0 0.0
    %417 = vmatprep.subr.mxu0 0.0
    %418 = vmatpush1.xpose.msra.mxu0 0.0
    %419 = vmatprep.subr.mxu0 0.0
    %420 = vmatpush1.xpose.msra.mxu0 0.0
    %421 = vmatprep.subr.mxu0 0.0
    %422 = vmatpush1.xpose.msra.mxu0 0.0
    %423 = vmatprep.subr.mxu0 0.0
    %424 = vmatpush1.xpose.msra.mxu0 0.0
    %425 = vmatprep.subr.mxu0 0.0
    %426 = vmatpush1.xpose.msra.mxu0 0.0
    %427 = vmatprep.subr.mxu0 0.0
    %428 = vmatpush1.xpose.msra.mxu0 0.0
    %429 = vmatprep.subr.mxu0 0.0
    %430 = vmatpush1.xpose.msra.mxu0 0.0
    %431 = vmatprep.subr.mxu0 0.0
    %432 = vmatpush1.xpose.msra.mxu0 0.0
    %433 = vmatprep.subr.mxu0 0.0
    %434 = vmatpush1.xpose.msra.mxu0 0.0
    %435 = vmatprep.subr.mxu0 0.0
    %436 = vmatpush1.xpose.msra.mxu0 0.0
    %437 = vmatprep.subr.mxu0 0.0
    %438 = vmatpush1.xpose.msra.mxu0 0.0
    %439 = vmatprep.subr.mxu0 0.0
    %440 = vmatpush1.xpose.msra.mxu0 0.0
    %441 = vmatprep.subr.mxu0 0.0
    %442 = vmatpush1.xpose.msra.mxu0 0.0
    %443 = vmatprep.subr.mxu0 0.0
    %444 = vmatpush1.xpose.msra.mxu0 0.0
    %445 = vmatprep.subr.mxu0 0.0
    %446 = vmatpush1.xpose.msra.mxu0 0.0
    %447 = vmatprep.subr.mxu0 0.0
    %448 = vmatpush1.xpose.msra.mxu0 0.0
    %449 = vmatprep.subr.mxu0 0.0
    %450 = vmatpush1.xpose.msra.mxu0 0.0
    %451 = vmatprep.mubr.f32.mxu0 0.0
    %452 = vmatmul.mubr.f32.gmra.mrb[0].mxu0 %v383
    %v453 = vpop.f32.mrb[0].mxu0
    %v454 = vadd.f32 0.0, %v453
    %v455 = vpop.f32.mrb[0].mxu0
    %456 = vdwg.mxu0
    %457 = vrot.lane.b32.xlu0 %v135, 96
    %v458 = vpop.permute.xlu0 %457
    %v459 = vsel %vm154, %v135, 0
    %v461 = vsel %vm154, %v458, 0
    %463 = vmatprep.subr.mxu0 0.0
    %464 = vmatpush1.xpose.msra.mxu0 %v461
    %465 = vmatprep.subr.mxu0 0.0
    %466 = vmatpush1.xpose.msra.mxu0 0.0
    %467 = vmatprep.subr.mxu0 0.0
    %468 = vmatpush1.xpose.msra.mxu0 0.0
    %469 = vmatprep.subr.mxu0 0.0
    %470 = vmatpush1.xpose.msra.mxu0 0.0
    %471 = vmatprep.subr.mxu0 0.0
    %472 = vmatpush1.xpose.msra.mxu0 0.0
    %473 = vmatprep.subr.mxu0 0.0
    %474 = vmatpush1.xpose.msra.mxu0 0.0
    %475 = vmatprep.subr.mxu0 0.0
    %476 = vmatpush1.xpose.msra.mxu0 0.0
    %477 = vmatprep.subr.mxu0 0.0
    %478 = vmatpush1.xpose.msra.mxu0 0.0
    %479 = vmatprep.subr.mxu0 0.0
    %480 = vmatpush1.xpose.msra.mxu0 0.0
    %481 = vmatprep.subr.mxu0 0.0
    %482 = vmatpush1.xpose.msra.mxu0 0.0
    %483 = vmatprep.subr.mxu0 0.0
    %484 = vmatpush1.xpose.msra.mxu0 0.0
    %485 = vmatprep.subr.mxu0 0.0
    %486 = vmatpush1.xpose.msra.mxu0 0.0
    %487 = vmatprep.subr.mxu0 0.0
    %488 = vmatpush1.xpose.msra.mxu0 0.0
    %489 = vmatprep.subr.mxu0 0.0
    %490 = vmatpush1.xpose.msra.mxu0 0.0
    %491 = vmatprep.subr.mxu0 0.0
    %492 = vmatpush1.xpose.msra.mxu0 0.0
    %493 = vmatprep.subr.mxu0 0.0
    %494 = vmatpush1.xpose.msra.mxu0 0.0
    %495 = vmatprep.subr.mxu0 0.0
    %496 = vmatpush1.xpose.msra.mxu0 0.0
    %497 = vmatprep.subr.mxu0 0.0
    %498 = vmatpush1.xpose.msra.mxu0 0.0
    %499 = vmatprep.subr.mxu0 0.0
    %500 = vmatpush1.xpose.msra.mxu0 0.0
    %501 = vmatprep.subr.mxu0 0.0
    %502 = vmatpush1.xpose.msra.mxu0 0.0
    %503 = vmatprep.subr.mxu0 0.0
    %504 = vmatpush1.xpose.msra.mxu0 0.0
    %505 = vmatprep.subr.mxu0 0.0
    %506 = vmatpush1.xpose.msra.mxu0 0.0
    %507 = vmatprep.subr.mxu0 0.0
    %508 = vmatpush1.xpose.msra.mxu0 0.0
    %509 = vmatprep.subr.mxu0 0.0
    %510 = vmatpush1.xpose.msra.mxu0 0.0
    %511 = vmatprep.subr.mxu0 0.0
    %512 = vmatpush1.xpose.msra.mxu0 0.0
    %513 = vmatprep.subr.mxu0 0.0
    %514 = vmatpush1.xpose.msra.mxu0 0.0
    %515 = vmatprep.subr.mxu0 0.0
    %516 = vmatpush1.xpose.msra.mxu0 0.0
    %517 = vmatprep.subr.mxu0 0.0
    %518 = vmatpush1.xpose.msra.mxu0 0.0
    %519 = vmatprep.subr.mxu0 0.0
    %520 = vmatpush1.xpose.msra.mxu0 0.0
    %521 = vmatprep.subr.mxu0 0.0
    %522 = vmatpush1.xpose.msra.mxu0 0.0
    %523 = vmatprep.subr.mxu0 0.0
    %524 = vmatpush1.xpose.msra.mxu0 0.0
    %525 = vmatprep.subr.mxu0 0.0
    %526 = vmatpush1.xpose.msra.mxu0 0.0
    %527 = vmatprep.mubr.f32.mxu0 0.0
    %528 = vmatmul.mubr.f32.gmra.mrb[0].mxu0 %v459
    %v529 = vpop.f32.mrb[0].mxu0
    %v530 = vadd.f32 0.0, %v529
    %v531 = vpop.f32.mrb[0].mxu0
    %532 = vdwg.mxu0
    %533 = vrot.lane.b32.xlu0 %v147, 96
    %v534 = vpop.permute.xlu0 %533
    %v535 = vsel %vm154, %v147, 0
    %v537 = vsel %vm154, %v534, 0
    %539 = vmatprep.subr.mxu0 0.0
    %540 = vmatpush1.xpose.msra.mxu0 %v537
    %541 = vmatprep.subr.mxu0 0.0
    %542 = vmatpush1.xpose.msra.mxu0 0.0
    %543 = vmatprep.subr.mxu0 0.0
    %544 = vmatpush1.xpose.msra.mxu0 0.0
    %545 = vmatprep.subr.mxu0 0.0
    %546 = vmatpush1.xpose.msra.mxu0 0.0
    %547 = vmatprep.subr.mxu0 0.0
    %548 = vmatpush1.xpose.msra.mxu0 0.0
    %549 = vmatprep.subr.mxu0 0.0
    %550 = vmatpush1.xpose.msra.mxu0 0.0
    %551 = vmatprep.subr.mxu0 0.0
    %552 = vmatpush1.xpose.msra.mxu0 0.0
    %553 = vmatprep.subr.mxu0 0.0
    %554 = vmatpush1.xpose.msra.mxu0 0.0
    %555 = vmatprep.subr.mxu0 0.0
    %556 = vmatpush1.xpose.msra.mxu0 0.0
    %557 = vmatprep.subr.mxu0 0.0
    %558 = vmatpush1.xpose.msra.mxu0 0.0
    %559 = vmatprep.subr.mxu0 0.0
    %560 = vmatpush1.xpose.msra.mxu0 0.0
    %561 = vmatprep.subr.mxu0 0.0
    %562 = vmatpush1.xpose.msra.mxu0 0.0
    %563 = vmatprep.subr.mxu0 0.0
    %564 = vmatpush1.xpose.msra.mxu0 0.0
    %565 = vmatprep.subr.mxu0 0.0
    %566 = vmatpush1.xpose.msra.mxu0 0.0
    %567 = vmatprep.subr.mxu0 0.0
    %568 = vmatpush1.xpose.msra.mxu0 0.0
    %569 = vmatprep.subr.mxu0 0.0
    %570 = vmatpush1.xpose.msra.mxu0 0.0
    %571 = vmatprep.subr.mxu0 0.0
    %572 = vmatpush1.xpose.msra.mxu0 0.0
    %573 = vmatprep.subr.mxu0 0.0
    %574 = vmatpush1.xpose.msra.mxu0 0.0
    %575 = vmatprep.subr.mxu0 0.0
    %576 = vmatpush1.xpose.msra.mxu0 0.0
    %577 = vmatprep.subr.mxu0 0.0
    %578 = vmatpush1.xpose.msra.mxu0 0.0
    %579 = vmatprep.subr.mxu0 0.0
    %580 = vmatpush1.xpose.msra.mxu0 0.0
    %581 = vmatprep.subr.mxu0 0.0
    %582 = vmatpush1.xpose.msra.mxu0 0.0
    %583 = vmatprep.subr.mxu0 0.0
    %584 = vmatpush1.xpose.msra.mxu0 0.0
    %585 = vmatprep.subr.mxu0 0.0
    %586 = vmatpush1.xpose.msra.mxu0 0.0
    %587 = vmatprep.subr.mxu0 0.0
    %588 = vmatpush1.xpose.msra.mxu0 0.0
    %589 = vmatprep.subr.mxu0 0.0
    %590 = vmatpush1.xpose.msra.mxu0 0.0
    %591 = vmatprep.subr.mxu0 0.0
    %592 = vmatpush1.xpose.msra.mxu0 0.0
    %593 = vmatprep.subr.mxu0 0.0
    %594 = vmatpush1.xpose.msra.mxu0 0.0
    %595 = vmatprep.subr.mxu0 0.0
    %596 = vmatpush1.xpose.msra.mxu0 0.0
    %597 = vmatprep.subr.mxu0 0.0
    %598 = vmatpush1.xpose.msra.mxu0 0.0
    %599 = vmatprep.subr.mxu0 0.0
    %600 = vmatpush1.xpose.msra.mxu0 0.0
    %601 = vmatprep.subr.mxu0 0.0
    %602 = vmatpush1.xpose.msra.mxu0 0.0
    %603 = vmatprep.mubr.f32.mxu0 0.0
    %604 = vmatmul.mubr.f32.gmra.mrb[0].mxu0 %v535
    %v605 = vpop.f32.mrb[0].mxu0
    %v606 = vadd.f32 0.0, %v605
    %v607 = vpop.f32.mrb[0].mxu0
    %608 = vdwg.mxu0
    %609 = vrot.lane.b32.xlu0 %v149, 96
    %v610 = vpop.permute.xlu0 %609
    %v611 = vsel %vm154, %v149, 0
    %v613 = vsel %vm154, %v610, 0
    %615 = vmatprep.subr.mxu0 0.0
    %616 = vmatpush1.xpose.msra.mxu0 %v613
    %617 = vmatprep.subr.mxu0 0.0
    %618 = vmatpush1.xpose.msra.mxu0 0.0
    %619 = vmatprep.subr.mxu0 0.0
    %620 = vmatpush1.xpose.msra.mxu0 0.0
    %621 = vmatprep.subr.mxu0 0.0
    %622 = vmatpush1.xpose.msra.mxu0 0.0
    %623 = vmatprep.subr.mxu0 0.0
    %624 = vmatpush1.xpose.msra.mxu0 0.0
    %625 = vmatprep.subr.mxu0 0.0
    %626 = vmatpush1.xpose.msra.mxu0 0.0
    %627 = vmatprep.subr.mxu0 0.0
    %628 = vmatpush1.xpose.msra.mxu0 0.0
    %629 = vmatprep.subr.mxu0 0.0
    %630 = vmatpush1.xpose.msra.mxu0 0.0
    %631 = vmatprep.subr.mxu0 0.0
    %632 = vmatpush1.xpose.msra.mxu0 0.0
    %633 = vmatprep.subr.mxu0 0.0
    %634 = vmatpush1.xpose.msra.mxu0 0.0
    %635 = vmatprep.subr.mxu0 0.0
    %636 = vmatpush1.xpose.msra.mxu0 0.0
    %637 = vmatprep.subr.mxu0 0.0
    %638 = vmatpush1.xpose.msra.mxu0 0.0
    %639 = vmatprep.subr.mxu0 0.0
    %640 = vmatpush1.xpose.msra.mxu0 0.0
    %641 = vmatprep.subr.mxu0 0.0
    %642 = vmatpush1.xpose.msra.mxu0 0.0
    %643 = vmatprep.subr.mxu0 0.0
    %644 = vmatpush1.xpose.msra.mxu0 0.0
    %645 = vmatprep.subr.mxu0 0.0
    %646 = vmatpush1.xpose.msra.mxu0 0.0
    %647 = vmatprep.subr.mxu0 0.0
    %648 = vmatpush1.xpose.msra.mxu0 0.0
    %649 = vmatprep.subr.mxu0 0.0
    %650 = vmatpush1.xpose.msra.mxu0 0.0
    %651 = vmatprep.subr.mxu0 0.0
    %652 = vmatpush1.xpose.msra.mxu0 0.0
    %653 = vmatprep.subr.mxu0 0.0
    %654 = vmatpush1.xpose.msra.mxu0 0.0
    %655 = vmatprep.subr.mxu0 0.0
    %656 = vmatpush1.xpose.msra.mxu0 0.0
    %657 = vmatprep.subr.mxu0 0.0
    %658 = vmatpush1.xpose.msra.mxu0 0.0
    %659 = vmatprep.subr.mxu0 0.0
    %660 = vmatpush1.xpose.msra.mxu0 0.0
    %661 = vmatprep.subr.mxu0 0.0
    %662 = vmatpush1.xpose.msra.mxu0 0.0
    %663 = vmatprep.subr.mxu0 0.0
    %664 = vmatpush1.xpose.msra.mxu0 0.0
    %665 = vmatprep.subr.mxu0 0.0
    %666 = vmatpush1.xpose.msra.mxu0 0.0
    %667 = vmatprep.subr.mxu0 0.0
    %668 = vmatpush1.xpose.msra.mxu0 0.0
    %669 = vmatprep.subr.mxu0 0.0
    %670 = vmatpush1.xpose.msra.mxu0 0.0
    %671 = vmatprep.subr.mxu0 0.0
    %672 = vmatpush1.xpose.msra.mxu0 0.0
    %673 = vmatprep.subr.mxu0 0.0
    %674 = vmatpush1.xpose.msra.mxu0 0.0
    %675 = vmatprep.subr.mxu0 0.0
    %676 = vmatpush1.xpose.msra.mxu0 0.0
    %677 = vmatprep.subr.mxu0 0.0
    %678 = vmatpush1.xpose.msra.mxu0 0.0
    %679 = vmatprep.mubr.f32.mxu0 0.0
    %680 = vmatmul.mubr.f32.gmra.mrb[0].mxu0 %v611
    %v681 = vpop.f32.mrb[0].mxu0
    %v682 = vadd.f32 0.0, %v681
    %v683 = vpop.f32.mrb[0].mxu0
    %684 = vdwg.mxu0
    %685 = vrot.lane.b32.xlu0 %v151, 96
    %v686 = vpop.permute.xlu0 %685
    %v687 = vsel %vm154, %v151, 0
    %v689 = vsel %vm154, %v686, 0
    %691 = vmatprep.subr.mxu0 0.0
    %692 = vmatpush1.xpose.msra.mxu0 %v689
    %693 = vmatprep.subr.mxu0 0.0
    %694 = vmatpush1.xpose.msra.mxu0 0.0
    %695 = vmatprep.subr.mxu0 0.0
    %696 = vmatpush1.xpose.msra.mxu0 0.0
    %697 = vmatprep.subr.mxu0 0.0
    %698 = vmatpush1.xpose.msra.mxu0 0.0
    %699 = vmatprep.subr.mxu0 0.0
    %700 = vmatpush1.xpose.msra.mxu0 0.0
    %701 = vmatprep.subr.mxu0 0.0
    %702 = vmatpush1.xpose.msra.mxu0 0.0
    %703 = vmatprep.subr.mxu0 0.0
    %704 = vmatpush1.xpose.msra.mxu0 0.0
    %705 = vmatprep.subr.mxu0 0.0
    %706 = vmatpush1.xpose.msra.mxu0 0.0
    %707 = vmatprep.subr.mxu0 0.0
    %708 = vmatpush1.xpose.msra.mxu0 0.0
    %709 = vmatprep.subr.mxu0 0.0
    %710 = vmatpush1.xpose.msra.mxu0 0.0
    %711 = vmatprep.subr.mxu0 0.0
    %712 = vmatpush1.xpose.msra.mxu0 0.0
    %713 = vmatprep.subr.mxu0 0.0
    %714 = vmatpush1.xpose.msra.mxu0 0.0
    %715 = vmatprep.subr.mxu0 0.0
    %716 = vmatpush1.xpose.msra.mxu0 0.0
    %717 = vmatprep.subr.mxu0 0.0
    %718 = vmatpush1.xpose.msra.mxu0 0.0
    %719 = vmatprep.subr.mxu0 0.0
    %720 = vmatpush1.xpose.msra.mxu0 0.0
    %721 = vmatprep.subr.mxu0 0.0
    %722 = vmatpush1.xpose.msra.mxu0 0.0
    %723 = vmatprep.subr.mxu0 0.0
    %724 = vmatpush1.xpose.msra.mxu0 0.0
    %725 = vmatprep.subr.mxu0 0.0
    %726 = vmatpush1.xpose.msra.mxu0 0.0
    %727 = vmatprep.subr.mxu0 0.0
    %728 = vmatpush1.xpose.msra.mxu0 0.0
    %729 = vmatprep.subr.mxu0 0.0
    %730 = vmatpush1.xpose.msra.mxu0 0.0
    %731 = vmatprep.subr.mxu0 0.0
    %732 = vmatpush1.xpose.msra.mxu0 0.0
    %733 = vmatprep.subr.mxu0 0.0
    %734 = vmatpush1.xpose.msra.mxu0 0.0
    %735 = vmatprep.subr.mxu0 0.0
    %736 = vmatpush1.xpose.msra.mxu0 0.0
    %737 = vmatprep.subr.mxu0 0.0
    %738 = vmatpush1.xpose.msra.mxu0 0.0
    %739 = vmatprep.subr.mxu0 0.0
    %740 = vmatpush1.xpose.msra.mxu0 0.0
    %741 = vmatprep.subr.mxu0 0.0
    %742 = vmatpush1.xpose.msra.mxu0 0.0
    %743 = vmatprep.subr.mxu0 0.0
    %744 = vmatpush1.xpose.msra.mxu0 0.0
    %745 = vmatprep.subr.mxu0 0.0
    %746 = vmatpush1.xpose.msra.mxu0 0.0
    %747 = vmatprep.subr.mxu0 0.0
    %748 = vmatpush1.xpose.msra.mxu0 0.0
    %749 = vmatprep.subr.mxu0 0.0
    %750 = vmatpush1.xpose.msra.mxu0 0.0
    %751 = vmatprep.subr.mxu0 0.0
    %752 = vmatpush1.xpose.msra.mxu0 0.0
    %753 = vmatprep.subr.mxu0 0.0
    %754 = vmatpush1.xpose.msra.mxu0 0.0
    %755 = vmatprep.mubr.f32.mxu0 0.0
    %756 = vmatmul.mubr.f32.gmra.mrb[0].mxu0 %v687
    %v757 = vpop.f32.mrb[0].mxu0
    %v758 = vadd.f32 0.0, %v757
    %v759 = vpop.f32.mrb[0].mxu0
    %760 = vdwg.mxu0
    %v761 = vsel %vm154, %v226, -inf
    %762 = vmax.xlane.f32.xlu0 %v761
    %v763 = vpop.xlane.xlu0 %762
    %v764 = vsel %vm154, %v302, -inf
    %765 = vmax.xlane.f32.xlu0 %v764
    %v766 = vpop.xlane.xlu0 %765
    %v767 = vsel %vm154, %v378, -inf
    %768 = vmax.xlane.f32.xlu0 %v767
    %v769 = vpop.xlane.xlu0 %768
    %v770 = vsel %vm154, %v454, -inf
    %771 = vmax.xlane.f32.xlu0 %v770
    %v772 = vpop.xlane.xlu0 %771
    %v773 = vsel %vm154, %v530, -inf
    %774 = vmax.xlane.f32.xlu0 %v773
    %v775 = vpop.xlane.xlu0 %774
    %v776 = vsel %vm154, %v606, -inf
    %777 = vmax.xlane.f32.xlu0 %v776
    %v778 = vpop.xlane.xlu0 %777
    %v779 = vsel %vm154, %v682, -inf
    %780 = vmax.xlane.f32.xlu0 %v779
    %v781 = vpop.xlane.xlu0 %780
    %v782 = vsel %vm154, %v758, -inf
    %783 = vmax.xlane.f32.xlu0 %v782
    %v784 = vpop.xlane.xlu0 %783
    %v785 = vsub.f32 %v226, %v763
    %v786 = vsub.f32 %v302, %v766
    %v787 = vsub.f32 %v378, %v769
    %v788 = vsub.f32 %v454, %v772
    %v789 = vsub.f32 %v530, %v775
    %v790 = vsub.f32 %v606, %v778
    %v791 = vsub.f32 %v682, %v781
    %v792 = vsub.f32 %v758, %v784
    %v793 = vmul.f32 %v785, 1.442695
    %v794 = vpow.pop %v793
    %v795 = vmul.f32 %v786, 1.442695
    %v796 = vpow.pop %v795
    %v797 = vmul.f32 %v787, 1.442695
    %v798 = vpow.pop %v797
    %v799 = vmul.f32 %v788, 1.442695
    %v800 = vpow.pop %v799
    %v801 = vmul.f32 %v789, 1.442695
    %v802 = vpow.pop %v801
    %v803 = vmul.f32 %v790, 1.442695
    %v804 = vpow.pop %v803
    %v805 = vmul.f32 %v791, 1.442695
    %v806 = vpow.pop %v805
    %v807 = vmul.f32 %v792, 1.442695
    %v808 = vpow.pop %v807
    %v809 = vsel %vm154, %v794, 0.0
    %810 = vadd.xlane.f32.xlu0 %v809
    %v811 = vpop.xlane.xlu0 %810
    %v812 = vsel %vm154, %v796, 0.0
    %813 = vadd.xlane.f32.xlu0 %v812
    %v814 = vpop.xlane.xlu0 %813
    %v815 = vsel %vm154, %v798, 0.0
    %816 = vadd.xlane.f32.xlu0 %v815
    %v817 = vpop.xlane.xlu0 %816
    %v818 = vsel %vm154, %v800, 0.0
    %819 = vadd.xlane.f32.xlu0 %v818
    %v820 = vpop.xlane.xlu0 %819
    %v821 = vsel %vm154, %v802, 0.0
    %822 = vadd.xlane.f32.xlu0 %v821
    %v823 = vpop.xlane.xlu0 %822
    %v824 = vsel %vm154, %v804, 0.0
    %825 = vadd.xlane.f32.xlu0 %v824
    %v826 = vpop.xlane.xlu0 %825
    %v827 = vsel %vm154, %v806, 0.0
    %828 = vadd.xlane.f32.xlu0 %v827
    %v829 = vpop.xlane.xlu0 %828
    %v830 = vsel %vm154, %v808, 0.0
    %831 = vadd.xlane.f32.xlu0 %v830
    %v832 = vpop.xlane.xlu0 %831
    %v833 = vrcp.pop %v811
    %v834 = vrcp.pop %v814
    %v835 = vrcp.pop %v817
    %v836 = vrcp.pop %v820
    %v837 = vrcp.pop %v823
    %v838 = vrcp.pop %v826
    %v839 = vrcp.pop %v829
    %v840 = vrcp.pop %v832
    %v841 = vmul.f32 %v794, %v833
    %v842 = vmul.f32 %v796, %v834
    %v843 = vmul.f32 %v798, %v835
    %v844 = vmul.f32 %v800, %v836
    %v845 = vmul.f32 %v802, %v837
    %v846 = vmul.f32 %v804, %v838
    %v847 = vmul.f32 %v806, %v839
    %v848 = vmul.f32 %v808, %v840
    %v851 = vsel %vm154, %v841, 0
    %853 = vmatprep.subr.mxu0 0.0
    %854 = vmatpush1.msra.mxu0 %v153
    %855 = vmatprep.subr.mxu0 0.0
    %856 = vmatpush1.msra.mxu0 0.0
    %857 = vmatprep.subr.mxu0 0.0
    %858 = vmatpush1.msra.mxu0 0.0
    %859 = vmatprep.subr.mxu0 0.0
    %860 = vmatpush1.msra.mxu0 0.0
    %861 = vmatprep.subr.mxu0 0.0
    %862 = vmatpush1.msra.mxu0 0.0
    %863 = vmatprep.subr.mxu0 0.0
    %864 = vmatpush1.msra.mxu0 0.0
    %865 = vmatprep.subr.mxu0 0.0
    %866 = vmatpush1.msra.mxu0 0.0
    %867 = vmatprep.subr.mxu0 0.0
    %868 = vmatpush1.msra.mxu0 0.0
    %869 = vmatprep.subr.mxu0 0.0
    %870 = vmatpush1.msra.mxu0 0.0
    %871 = vmatprep.subr.mxu0 0.0
    %872 = vmatpush1.msra.mxu0 0.0
    %873 = vmatprep.subr.mxu0 0.0
    %874 = vmatpush1.msra.mxu0 0.0
    %875 = vmatprep.subr.mxu0 0.0
    %876 = vmatpush1.msra.mxu0 0.0
    %877 = vmatprep.subr.mxu0 0.0
    %878 = vmatpush1.msra.mxu0 0.0
    %879 = vmatprep.subr.mxu0 0.0
    %880 = vmatpush1.msra.mxu0 0.0
    %881 = vmatprep.subr.mxu0 0.0
    %882 = vmatpush1.msra.mxu0 0.0
    %883 = vmatprep.subr.mxu0 0.0
    %884 = vmatpush1.msra.mxu0 0.0
    %885 = vmatprep.subr.mxu0 0.0
    %886 = vmatpush1.msra.mxu0 0.0
    %887 = vmatprep.subr.mxu0 0.0
    %888 = vmatpush1.msra.mxu0 0.0
    %889 = vmatprep.subr.mxu0 0.0
    %890 = vmatpush1.msra.mxu0 0.0
    %891 = vmatprep.subr.mxu0 0.0
    %892 = vmatpush1.msra.mxu0 0.0
    %893 = vmatprep.subr.mxu0 0.0
    %894 = vmatpush1.msra.mxu0 0.0
    %895 = vmatprep.subr.mxu0 0.0
    %896 = vmatpush1.msra.mxu0 0.0
    %897 = vmatprep.subr.mxu0 0.0
    %898 = vmatpush1.msra.mxu0 0.0
    %899 = vmatprep.subr.mxu0 0.0
    %900 = vmatpush1.msra.mxu0 0.0
    %901 = vmatprep.subr.mxu0 0.0
    %902 = vmatpush1.msra.mxu0 0.0
    %903 = vmatprep.subr.mxu0 0.0
    %904 = vmatpush1.msra.mxu0 0.0
    %905 = vmatprep.subr.mxu0 0.0
    %906 = vmatpush1.msra.mxu0 0.0
    %907 = vmatprep.subr.mxu0 0.0
    %908 = vmatpush1.msra.mxu0 0.0
    %909 = vmatprep.subr.mxu0 0.0
    %910 = vmatpush1.msra.mxu0 0.0
    %911 = vmatprep.subr.mxu0 0.0
    %912 = vmatpush1.msra.mxu0 0.0
    %913 = vmatprep.subr.mxu0 0.0
    %914 = vmatpush1.msra.mxu0 0.0
    %915 = vmatprep.subr.mxu0 0.0
    %916 = vmatpush1.msra.mxu0 0.0
    %917 = vmatprep.mubr.f32.mxu0 0.0
    %918 = vmatmul.mubr.f32.gmra.mrb[0].mxu0 %v851
    %v919 = vpop.f32.mrb[0].mxu0
    %v920 = vadd.f32 0.0, %v919
    %v921 = vpop.f32.mrb[0].mxu0
    %922 = vdwg.mxu0
    %v925 = vsel %vm154, %v842, 0
    %927 = vmatprep.subr.mxu0 0.0
    %928 = vmatpush1.msra.mxu0 %v230
    %929 = vmatprep.subr.mxu0 0.0
    %930 = vmatpush1.msra.mxu0 0.0
    %931 = vmatprep.subr.mxu0 0.0
    %932 = vmatpush1.msra.mxu0 0.0
    %933 = vmatprep.subr.mxu0 0.0
    %934 = vmatpush1.msra.mxu0 0.0
    %935 = vmatprep.subr.mxu0 0.0
    %936 = vmatpush1.msra.mxu0 0.0
    %937 = vmatprep.subr.mxu0 0.0
    %938 = vmatpush1.msra.mxu0 0.0
    %939 = vmatprep.subr.mxu0 0.0
    %940 = vmatpush1.msra.mxu0 0.0
    %941 = vmatprep.subr.mxu0 0.0
    %942 = vmatpush1.msra.mxu0 0.0
    %943 = vmatprep.subr.mxu0 0.0
    %944 = vmatpush1.msra.mxu0 0.0
    %945 = vmatprep.subr.mxu0 0.0
    %946 = vmatpush1.msra.mxu0 0.0
    %947 = vmatprep.subr.mxu0 0.0
    %948 = vmatpush1.msra.mxu0 0.0
    %949 = vmatprep.subr.mxu0 0.0
    %950 = vmatpush1.msra.mxu0 0.0
    %951 = vmatprep.subr.mxu0 0.0
    %952 = vmatpush1.msra.mxu0 0.0
    %953 = vmatprep.subr.mxu0 0.0
    %954 = vmatpush1.msra.mxu0 0.0
    %955 = vmatprep.subr.mxu0 0.0
    %956 = vmatpush1.msra.mxu0 0.0
    %957 = vmatprep.subr.mxu0 0.0
    %958 = vmatpush1.msra.mxu0 0.0
    %959 = vmatprep.subr.mxu0 0.0
    %960 = vmatpush1.msra.mxu0 0.0
    %961 = vmatprep.subr.mxu0 0.0
    %962 = vmatpush1.msra.mxu0 0.0
    %963 = vmatprep.subr.mxu0 0.0
    %964 = vmatpush1.msra.mxu0 0.0
    %965 = vmatprep.subr.mxu0 0.0
    %966 = vmatpush1.msra.mxu0 0.0
    %967 = vmatprep.subr.mxu0 0.0
    %968 = vmatpush1.msra.mxu0 0.0
    %969 = vmatprep.subr.mxu0 0.0
    %970 = vmatpush1.msra.mxu0 0.0
    %971 = vmatprep.subr.mxu0 0.0
    %972 = vmatpush1.msra.mxu0 0.0
    %973 = vmatprep.subr.mxu0 0.0
    %974 = vmatpush1.msra.mxu0 0.0
    %975 = vmatprep.subr.mxu0 0.0
    %976 = vmatpush1.msra.mxu0 0.0
    %977 = vmatprep.subr.mxu0 0.0
    %978 = vmatpush1.msra.mxu0 0.0
    %979 = vmatprep.subr.mxu0 0.0
    %980 = vmatpush1.msra.mxu0 0.0
    %981 = vmatprep.subr.mxu0 0.0
    %982 = vmatpush1.msra.mxu0 0.0
    %983 = vmatprep.subr.mxu0 0.0
    %984 = vmatpush1.msra.mxu0 0.0
    %985 = vmatprep.subr.mxu0 0.0
    %986 = vmatpush1.msra.mxu0 0.0
    %987 = vmatprep.subr.mxu0 0.0
    %988 = vmatpush1.msra.mxu0 0.0
    %989 = vmatprep.subr.mxu0 0.0
    %990 = vmatpush1.msra.mxu0 0.0
    %991 = vmatprep.mubr.f32.mxu0 0.0
    %992 = vmatmul.mubr.f32.gmra.mrb[0].mxu0 %v925
    %v993 = vpop.f32.mrb[0].mxu0
    %v994 = vadd.f32 0.0, %v993
    %v995 = vpop.f32.mrb[0].mxu0
    %996 = vdwg.mxu0
    %v999 = vsel %vm154, %v843, 0
    %1001 = vmatprep.subr.mxu0 0.0
    %1002 = vmatpush1.msra.mxu0 %v306
    %1003 = vmatprep.subr.mxu0 0.0
    %1004 = vmatpush1.msra.mxu0 0.0
    %1005 = vmatprep.subr.mxu0 0.0
    %1006 = vmatpush1.msra.mxu0 0.0
    %1007 = vmatprep.subr.mxu0 0.0
    %1008 = vmatpush1.msra.mxu0 0.0
    %1009 = vmatprep.subr.mxu0 0.0
    %1010 = vmatpush1.msra.mxu0 0.0
    %1011 = vmatprep.subr.mxu0 0.0
    %1012 = vmatpush1.msra.mxu0 0.0
    %1013 = vmatprep.subr.mxu0 0.0
    %1014 = vmatpush1.msra.mxu0 0.0
    %1015 = vmatprep.subr.mxu0 0.0
    %1016 = vmatpush1.msra.mxu0 0.0
    %1017 = vmatprep.subr.mxu0 0.0
    %1018 = vmatpush1.msra.mxu0 0.0
    %1019 = vmatprep.subr.mxu0 0.0
    %1020 = vmatpush1.msra.mxu0 0.0
    %1021 = vmatprep.subr.mxu0 0.0
    %1022 = vmatpush1.msra.mxu0 0.0
    %1023 = vmatprep.subr.mxu0 0.0
    %1024 = vmatpush1.msra.mxu0 0.0
    %1025 = vmatprep.subr.mxu0 0.0
    %1026 = vmatpush1.msra.mxu0 0.0
    %1027 = vmatprep.subr.mxu0 0.0
    %1028 = vmatpush1.msra.mxu0 0.0
    %1029 = vmatprep.subr.mxu0 0.0
    %1030 = vmatpush1.msra.mxu0 0.0
    %1031 = vmatprep.subr.mxu0 0.0
    %1032 = vmatpush1.msra.mxu0 0.0
    %1033 = vmatprep.subr.mxu0 0.0
    %1034 = vmatpush1.msra.mxu0 0.0
    %1035 = vmatprep.subr.mxu0 0.0
    %1036 = vmatpush1.msra.mxu0 0.0
    %1037 = vmatprep.subr.mxu0 0.0
    %1038 = vmatpush1.msra.mxu0 0.0
    %1039 = vmatprep.subr.mxu0 0.0
    %1040 = vmatpush1.msra.mxu0 0.0
    %1041 = vmatprep.subr.mxu0 0.0
    %1042 = vmatpush1.msra.mxu0 0.0
    %1043 = vmatprep.subr.mxu0 0.0
    %1044 = vmatpush1.msra.mxu0 0.0
    %1045 = vmatprep.subr.mxu0 0.0
    %1046 = vmatpush1.msra.mxu0 0.0
    %1047 = vmatprep.subr.mxu0 0.0
    %1048 = vmatpush1.msra.mxu0 0.0
    %1049 = vmatprep.subr.mxu0 0.0
    %1050 = vmatpush1.msra.mxu0 0.0
    %1051 = vmatprep.subr.mxu0 0.0
    %1052 = vmatpush1.msra.mxu0 0.0
    %1053 = vmatprep.subr.mxu0 0.0
    %1054 = vmatpush1.msra.mxu0 0.0
    %1055 = vmatprep.subr.mxu0 0.0
    %1056 = vmatpush1.msra.mxu0 0.0
    %1057 = vmatprep.subr.mxu0 0.0
    %1058 = vmatpush1.msra.mxu0 0.0
    %1059 = vmatprep.subr.mxu0 0.0
    %1060 = vmatpush1.msra.mxu0 0.0
    %1061 = vmatprep.subr.mxu0 0.0
    %1062 = vmatpush1.msra.mxu0 0.0
    %1063 = vmatprep.subr.mxu0 0.0
    %1064 = vmatpush1.msra.mxu0 0.0
    %1065 = vmatprep.mubr.f32.mxu0 0.0
    %1066 = vmatmul.mubr.f32.gmra.mrb[0].mxu0 %v999
    %v1067 = vpop.f32.mrb[0].mxu0
    %v1068 = vadd.f32 0.0, %v1067
    %v1069 = vpop.f32.mrb[0].mxu0
    %1070 = vdwg.mxu0
    %v1073 = vsel %vm154, %v844, 0
    %1075 = vmatprep.subr.mxu0 0.0
    %1076 = vmatpush1.msra.mxu0 %v382
    %1077 = vmatprep.subr.mxu0 0.0
    %1078 = vmatpush1.msra.mxu0 0.0
    %1079 = vmatprep.subr.mxu0 0.0
    %1080 = vmatpush1.msra.mxu0 0.0
    %1081 = vmatprep.subr.mxu0 0.0
    %1082 = vmatpush1.msra.mxu0 0.0
    %1083 = vmatprep.subr.mxu0 0.0
    %1084 = vmatpush1.msra.mxu0 0.0
    %1085 = vmatprep.subr.mxu0 0.0
    %1086 = vmatpush1.msra.mxu0 0.0
    %1087 = vmatprep.subr.mxu0 0.0
    %1088 = vmatpush1.msra.mxu0 0.0
    %1089 = vmatprep.subr.mxu0 0.0
    %1090 = vmatpush1.msra.mxu0 0.0
    %1091 = vmatprep.subr.mxu0 0.0
    %1092 = vmatpush1.msra.mxu0 0.0
    %1093 = vmatprep.subr.mxu0 0.0
    %1094 = vmatpush1.msra.mxu0 0.0
    %1095 = vmatprep.subr.mxu0 0.0
    %1096 = vmatpush1.msra.mxu0 0.0
    %1097 = vmatprep.subr.mxu0 0.0
    %1098 = vmatpush1.msra.mxu0 0.0
    %1099 = vmatprep.subr.mxu0 0.0
    %1100 = vmatpush1.msra.mxu0 0.0
    %1101 = vmatprep.subr.mxu0 0.0
    %1102 = vmatpush1.msra.mxu0 0.0
    %1103 = vmatprep.subr.mxu0 0.0
    %1104 = vmatpush1.msra.mxu0 0.0
    %1105 = vmatprep.subr.mxu0 0.0
    %1106 = vmatpush1.msra.mxu0 0.0
    %1107 = vmatprep.subr.mxu0 0.0
    %1108 = vmatpush1.msra.mxu0 0.0
    %1109 = vmatprep.subr.mxu0 0.0
    %1110 = vmatpush1.msra.mxu0 0.0
    %1111 = vmatprep.subr.mxu0 0.0
    %1112 = vmatpush1.msra.mxu0 0.0
    %1113 = vmatprep.subr.mxu0 0.0
    %1114 = vmatpush1.msra.mxu0 0.0
    %1115 = vmatprep.subr.mxu0 0.0
    %1116 = vmatpush1.msra.mxu0 0.0
    %1117 = vmatprep.subr.mxu0 0.0
    %1118 = vmatpush1.msra.mxu0 0.0
    %1119 = vmatprep.subr.mxu0 0.0
    %1120 = vmatpush1.msra.mxu0 0.0
    %1121 = vmatprep.subr.mxu0 0.0
    %1122 = vmatpush1.msra.mxu0 0.0
    %1123 = vmatprep.subr.mxu0 0.0
    %1124 = vmatpush1.msra.mxu0 0.0
    %1125 = vmatprep.subr.mxu0 0.0
    %1126 = vmatpush1.msra.mxu0 0.0
    %1127 = vmatprep.subr.mxu0 0.0
    %1128 = vmatpush1.msra.mxu0 0.0
    %1129 = vmatprep.subr.mxu0 0.0
    %1130 = vmatpush1.msra.mxu0 0.0
    %1131 = vmatprep.subr.mxu0 0.0
    %1132 = vmatpush1.msra.mxu0 0.0
    %1133 = vmatprep.subr.mxu0 0.0
    %1134 = vmatpush1.msra.mxu0 0.0
    %1135 = vmatprep.subr.mxu0 0.0
    %1136 = vmatpush1.msra.mxu0 0.0
    %1137 = vmatprep.subr.mxu0 0.0
    %1138 = vmatpush1.msra.mxu0 0.0
    %1139 = vmatprep.mubr.f32.mxu0 0.0
    %1140 = vmatmul.mubr.f32.gmra.mrb[0].mxu0 %v1073
    %v1141 = vpop.f32.mrb[0].mxu0
    %v1142 = vadd.f32 0.0, %v1141
    %v1143 = vpop.f32.mrb[0].mxu0
    %1144 = vdwg.mxu0
    %v1147 = vsel %vm154, %v845, 0
    %1149 = vmatprep.subr.mxu0 0.0
    %1150 = vmatpush1.msra.mxu0 %v458
    %1151 = vmatprep.subr.mxu0 0.0
    %1152 = vmatpush1.msra.mxu0 0.0
    %1153 = vmatprep.subr.mxu0 0.0
    %1154 = vmatpush1.msra.mxu0 0.0
    %1155 = vmatprep.subr.mxu0 0.0
    %1156 = vmatpush1.msra.mxu0 0.0
    %1157 = vmatprep.subr.mxu0 0.0
    %1158 = vmatpush1.msra.mxu0 0.0
    %1159 = vmatprep.subr.mxu0 0.0
    %1160 = vmatpush1.msra.mxu0 0.0
    %1161 = vmatprep.subr.mxu0 0.0
    %1162 = vmatpush1.msra.mxu0 0.0
    %1163 = vmatprep.subr.mxu0 0.0
    %1164 = vmatpush1.msra.mxu0 0.0
    %1165 = vmatprep.subr.mxu0 0.0
    %1166 = vmatpush1.msra.mxu0 0.0
    %1167 = vmatprep.subr.mxu0 0.0
    %1168 = vmatpush1.msra.mxu0 0.0
    %1169 = vmatprep.subr.mxu0 0.0
    %1170 = vmatpush1.msra.mxu0 0.0
    %1171 = vmatprep.subr.mxu0 0.0
    %1172 = vmatpush1.msra.mxu0 0.0
    %1173 = vmatprep.subr.mxu0 0.0
    %1174 = vmatpush1.msra.mxu0 0.0
    %1175 = vmatprep.subr.mxu0 0.0
    %1176 = vmatpush1.msra.mxu0 0.0
    %1177 = vmatprep.subr.mxu0 0.0
    %1178 = vmatpush1.msra.mxu0 0.0
    %1179 = vmatprep.subr.mxu0 0.0
    %1180 = vmatpush1.msra.mxu0 0.0
    %1181 = vmatprep.subr.mxu0 0.0
    %1182 = vmatpush1.msra.mxu0 0.0
    %1183 = vmatprep.subr.mxu0 0.0
    %1184 = vmatpush1.msra.mxu0 0.0
    %1185 = vmatprep.subr.mxu0 0.0
    %1186 = vmatpush1.msra.mxu0 0.0
    %1187 = vmatprep.subr.mxu0 0.0
    %1188 = vmatpush1.msra.mxu0 0.0
    %1189 = vmatprep.subr.mxu0 0.0
    %1190 = vmatpush1.msra.mxu0 0.0
    %1191 = vmatprep.subr.mxu0 0.0
    %1192 = vmatpush1.msra.mxu0 0.0
    %1193 = vmatprep.subr.mxu0 0.0
    %1194 = vmatpush1.msra.mxu0 0.0
    %1195 = vmatprep.subr.mxu0 0.0
    %1196 = vmatpush1.msra.mxu0 0.0
    %1197 = vmatprep.subr.mxu0 0.0
    %1198 = vmatpush1.msra.mxu0 0.0
    %1199 = vmatprep.subr.mxu0 0.0
    %1200 = vmatpush1.msra.mxu0 0.0
    %1201 = vmatprep.subr.mxu0 0.0
    %1202 = vmatpush1.msra.mxu0 0.0
    %1203 = vmatprep.subr.mxu0 0.0
    %1204 = vmatpush1.msra.mxu0 0.0
    %1205 = vmatprep.subr.mxu0 0.0
    %1206 = vmatpush1.msra.mxu0 0.0
    %1207 = vmatprep.subr.mxu0 0.0
    %1208 = vmatpush1.msra.mxu0 0.0
    %1209 = vmatprep.subr.mxu0 0.0
    %1210 = vmatpush1.msra.mxu0 0.0
    %1211 = vmatprep.subr.mxu0 0.0
    %1212 = vmatpush1.msra.mxu0 0.0
    %1213 = vmatprep.mubr.f32.mxu0 0.0
    %1214 = vmatmul.mubr.f32.gmra.mrb[0].mxu0 %v1147
    %v1215 = vpop.f32.mrb[0].mxu0
    %v1216 = vadd.f32 0.0, %v1215
    %v1217 = vpop.f32.mrb[0].mxu0
    %1218 = vdwg.mxu0
    %v1221 = vsel %vm154, %v846, 0
    %1223 = vmatprep.subr.mxu0 0.0
    %1224 = vmatpush1.msra.mxu0 %v534
    %1225 = vmatprep.subr.mxu0 0.0
    %1226 = vmatpush1.msra.mxu0 0.0
    %1227 = vmatprep.subr.mxu0 0.0
    %1228 = vmatpush1.msra.mxu0 0.0
    %1229 = vmatprep.subr.mxu0 0.0
    %1230 = vmatpush1.msra.mxu0 0.0
    %1231 = vmatprep.subr.mxu0 0.0
    %1232 = vmatpush1.msra.mxu0 0.0
    %1233 = vmatprep.subr.mxu0 0.0
    %1234 = vmatpush1.msra.mxu0 0.0
    %1235 = vmatprep.subr.mxu0 0.0
    %1236 = vmatpush1.msra.mxu0 0.0
    %1237 = vmatprep.subr.mxu0 0.0
    %1238 = vmatpush1.msra.mxu0 0.0
    %1239 = vmatprep.subr.mxu0 0.0
    %1240 = vmatpush1.msra.mxu0 0.0
    %1241 = vmatprep.subr.mxu0 0.0
    %1242 = vmatpush1.msra.mxu0 0.0
    %1243 = vmatprep.subr.mxu0 0.0
    %1244 = vmatpush1.msra.mxu0 0.0
    %1245 = vmatprep.subr.mxu0 0.0
    %1246 = vmatpush1.msra.mxu0 0.0
    %1247 = vmatprep.subr.mxu0 0.0
    %1248 = vmatpush1.msra.mxu0 0.0
    %1249 = vmatprep.subr.mxu0 0.0
    %1250 = vmatpush1.msra.mxu0 0.0
    %1251 = vmatprep.subr.mxu0 0.0
    %1252 = vmatpush1.msra.mxu0 0.0
    %1253 = vmatprep.subr.mxu0 0.0
    %1254 = vmatpush1.msra.mxu0 0.0
    %1255 = vmatprep.subr.mxu0 0.0
    %1256 = vmatpush1.msra.mxu0 0.0
    %1257 = vmatprep.subr.mxu0 0.0
    %1258 = vmatpush1.msra.mxu0 0.0
    %1259 = vmatprep.subr.mxu0 0.0
    %1260 = vmatpush1.msra.mxu0 0.0
    %1261 = vmatprep.subr.mxu0 0.0
    %1262 = vmatpush1.msra.mxu0 0.0
    %1263 = vmatprep.subr.mxu0 0.0
    %1264 = vmatpush1.msra.mxu0 0.0
    %1265 = vmatprep.subr.mxu0 0.0
    %1266 = vmatpush1.msra.mxu0 0.0
    %1267 = vmatprep.subr.mxu0 0.0
    %1268 = vmatpush1.msra.mxu0 0.0
    %1269 = vmatprep.subr.mxu0 0.0
    %1270 = vmatpush1.msra.mxu0 0.0
    %1271 = vmatprep.subr.mxu0 0.0
    %1272 = vmatpush1.msra.mxu0 0.0
    %1273 = vmatprep.subr.mxu0 0.0
    %1274 = vmatpush1.msra.mxu0 0.0
    %1275 = vmatprep.subr.mxu0 0.0
    %1276 = vmatpush1.msra.mxu0 0.0
    %1277 = vmatprep.subr.mxu0 0.0
    %1278 = vmatpush1.msra.mxu0 0.0
    %1279 = vmatprep.subr.mxu0 0.0
    %1280 = vmatpush1.msra.mxu0 0.0
    %1281 = vmatprep.subr.mxu0 0.0
    %1282 = vmatpush1.msra.mxu0 0.0
    %1283 = vmatprep.subr.mxu0 0.0
    %1284 = vmatpush1.msra.mxu0 0.0
    %1285 = vmatprep.subr.mxu0 0.0
    %1286 = vmatpush1.msra.mxu0 0.0
    %1287 = vmatprep.mubr.f32.mxu0 0.0
    %1288 = vmatmul.mubr.f32.gmra.mrb[0].mxu0 %v1221
    %v1289 = vpop.f32.mrb[0].mxu0
    %v1290 = vadd.f32 0.0, %v1289
    %v1291 = vpop.f32.mrb[0].mxu0
    %1292 = vdwg.mxu0
    %v1295 = vsel %vm154, %v847, 0
    %1297 = vmatprep.subr.mxu0 0.0
    %1298 = vmatpush1.msra.mxu0 %v610
    %1299 = vmatprep.subr.mxu0 0.0
    %1300 = vmatpush1.msra.mxu0 0.0
    %1301 = vmatprep.subr.mxu0 0.0
    %1302 = vmatpush1.msra.mxu0 0.0
    %1303 = vmatprep.subr.mxu0 0.0
    %1304 = vmatpush1.msra.mxu0 0.0
    %1305 = vmatprep.subr.mxu0 0.0
    %1306 = vmatpush1.msra.mxu0 0.0
    %1307 = vmatprep.subr.mxu0 0.0
    %1308 = vmatpush1.msra.mxu0 0.0
    %1309 = vmatprep.subr.mxu0 0.0
    %1310 = vmatpush1.msra.mxu0 0.0
    %1311 = vmatprep.subr.mxu0 0.0
    %1312 = vmatpush1.msra.mxu0 0.0
    %1313 = vmatprep.subr.mxu0 0.0
    %1314 = vmatpush1.msra.mxu0 0.0
    %1315 = vmatprep.subr.mxu0 0.0
    %1316 = vmatpush1.msra.mxu0 0.0
    %1317 = vmatprep.subr.mxu0 0.0
    %1318 = vmatpush1.msra.mxu0 0.0
    %1319 = vmatprep.subr.mxu0 0.0
    %1320 = vmatpush1.msra.mxu0 0.0
    %1321 = vmatprep.subr.mxu0 0.0
    %1322 = vmatpush1.msra.mxu0 0.0
    %1323 = vmatprep.subr.mxu0 0.0
    %1324 = vmatpush1.msra.mxu0 0.0
    %1325 = vmatprep.subr.mxu0 0.0
    %1326 = vmatpush1.msra.mxu0 0.0
    %1327 = vmatprep.subr.mxu0 0.0
    %1328 = vmatpush1.msra.mxu0 0.0
    %1329 = vmatprep.subr.mxu0 0.0
    %1330 = vmatpush1.msra.mxu0 0.0
    %1331 = vmatprep.subr.mxu0 0.0
    %1332 = vmatpush1.msra.mxu0 0.0
    %1333 = vmatprep.subr.mxu0 0.0
    %1334 = vmatpush1.msra.mxu0 0.0
    %1335 = vmatprep.subr.mxu0 0.0
    %1336 = vmatpush1.msra.mxu0 0.0
    %1337 = vmatprep.subr.mxu0 0.0
    %1338 = vmatpush1.msra.mxu0 0.0
    %1339 = vmatprep.subr.mxu0 0.0
    %1340 = vmatpush1.msra.mxu0 0.0
    %1341 = vmatprep.subr.mxu0 0.0
    %1342 = vmatpush1.msra.mxu0 0.0
    %1343 = vmatprep.subr.mxu0 0.0
    %1344 = vmatpush1.msra.mxu0 0.0
    %1345 = vmatprep.subr.mxu0 0.0
    %1346 = vmatpush1.msra.mxu0 0.0
    %1347 = vmatprep.subr.mxu0 0.0
    %1348 = vmatpush1.msra.mxu0 0.0
    %1349 = vmatprep.subr.mxu0 0.0
    %1350 = vmatpush1.msra.mxu0 0.0
    %1351 = vmatprep.subr.mxu0 0.0
    %1352 = vmatpush1.msra.mxu0 0.0
    %1353 = vmatprep.subr.mxu0 0.0
    %1354 = vmatpush1.msra.mxu0 0.0
    %1355 = vmatprep.subr.mxu0 0.0
    %1356 = vmatpush1.msra.mxu0 0.0
    %1357 = vmatprep.subr.mxu0 0.0
    %1358 = vmatpush1.msra.mxu0 0.0
    %1359 = vmatprep.subr.mxu0 0.0
    %1360 = vmatpush1.msra.mxu0 0.0
    %1361 = vmatprep.mubr.f32.mxu0 0.0
    %1362 = vmatmul.mubr.f32.gmra.mrb[0].mxu0 %v1295
    %v1363 = vpop.f32.mrb[0].mxu0
    %v1364 = vadd.f32 0.0, %v1363
    %v1365 = vpop.f32.mrb[0].mxu0
    %1366 = vdwg.mxu0
    %v1369 = vsel %vm154, %v848, 0
    %1371 = vmatprep.subr.mxu0 0.0
    %1372 = vmatpush1.msra.mxu0 %v686
    %1373 = vmatprep.subr.mxu0 0.0
    %1374 = vmatpush1.msra.mxu0 0.0
    %1375 = vmatprep.subr.mxu0 0.0
    %1376 = vmatpush1.msra.mxu0 0.0
    %1377 = vmatprep.subr.mxu0 0.0
    %1378 = vmatpush1.msra.mxu0 0.0
    %1379 = vmatprep.subr.mxu0 0.0
    %1380 = vmatpush1.msra.mxu0 0.0
    %1381 = vmatprep.subr.mxu0 0.0
    %1382 = vmatpush1.msra.mxu0 0.0
    %1383 = vmatprep.subr.mxu0 0.0
    %1384 = vmatpush1.msra.mxu0 0.0
    %1385 = vmatprep.subr.mxu0 0.0
    %1386 = vmatpush1.msra.mxu0 0.0
    %1387 = vmatprep.subr.mxu0 0.0
    %1388 = vmatpush1.msra.mxu0 0.0
    %1389 = vmatprep.subr.mxu0 0.0
    %1390 = vmatpush1.msra.mxu0 0.0
    %1391 = vmatprep.subr.mxu0 0.0
    %1392 = vmatpush1.msra.mxu0 0.0
    %1393 = vmatprep.subr.mxu0 0.0
    %1394 = vmatpush1.msra.mxu0 0.0
    %1395 = vmatprep.subr.mxu0 0.0
    %1396 = vmatpush1.msra.mxu0 0.0
    %1397 = vmatprep.subr.mxu0 0.0
    %1398 = vmatpush1.msra.mxu0 0.0
    %1399 = vmatprep.subr.mxu0 0.0
    %1400 = vmatpush1.msra.mxu0 0.0
    %1401 = vmatprep.subr.mxu0 0.0
    %1402 = vmatpush1.msra.mxu0 0.0
    %1403 = vmatprep.subr.mxu0 0.0
    %1404 = vmatpush1.msra.mxu0 0.0
    %1405 = vmatprep.subr.mxu0 0.0
    %1406 = vmatpush1.msra.mxu0 0.0
    %1407 = vmatprep.subr.mxu0 0.0
    %1408 = vmatpush1.msra.mxu0 0.0
    %1409 = vmatprep.subr.mxu0 0.0
    %1410 = vmatpush1.msra.mxu0 0.0
    %1411 = vmatprep.subr.mxu0 0.0
    %1412 = vmatpush1.msra.mxu0 0.0
    %1413 = vmatprep.subr.mxu0 0.0
    %1414 = vmatpush1.msra.mxu0 0.0
    %1415 = vmatprep.subr.mxu0 0.0
    %1416 = vmatpush1.msra.mxu0 0.0
    %1417 = vmatprep.subr.mxu0 0.0
    %1418 = vmatpush1.msra.mxu0 0.0
    %1419 = vmatprep.subr.mxu0 0.0
    %1420 = vmatpush1.msra.mxu0 0.0
    %1421 = vmatprep.subr.mxu0 0.0
    %1422 = vmatpush1.msra.mxu0 0.0
    %1423 = vmatprep.subr.mxu0 0.0
    %1424 = vmatpush1.msra.mxu0 0.0
    %1425 = vmatprep.subr.mxu0 0.0
    %1426 = vmatpush1.msra.mxu0 0.0
    %1427 = vmatprep.subr.mxu0 0.0
    %1428 = vmatpush1.msra.mxu0 0.0
    %1429 = vmatprep.subr.mxu0 0.0
    %1430 = vmatpush1.msra.mxu0 0.0
    %1431 = vmatprep.subr.mxu0 0.0
    %1432 = vmatpush1.msra.mxu0 0.0
    %1433 = vmatprep.subr.mxu0 0.0
    %1434 = vmatpush1.msra.mxu0 0.0
    %1435 = vmatprep.mubr.f32.mxu0 0.0
    %1436 = vmatmul.mubr.f32.gmra.mrb[0].mxu0 %v1369
    %v1437 = vpop.f32.mrb[0].mxu0
    %v1438 = vadd.f32 0.0, %v1437
    %v1439 = vpop.f32.mrb[0].mxu0
    %1440 = vdwg.mxu0
    %1441 = vst.msk [vmem:[#allocation7] sm:$0xff] %vm154, %v920
    %1443 = vrot.lane.b32.xlu0 %v994, 8
    %v1444 = vpop.permute.xlu0 %1443
    %vm1446 = vcmask 130112
    %1447 = vst.msk [vmem:[#allocation7] sm:$0xff] %vm1446, %v1444
    %1449 = vrot.lane.b32.xlu0 %v1068, 16
    %v1450 = vpop.permute.xlu0 %1449
    %vm1452 = vcmask 195712
    %1453 = vst.msk [vmem:[#allocation7] sm:$0xff] %vm1452, %v1450
    %1455 = vrot.lane.b32.xlu0 %v1142, 24
    %v1456 = vpop.permute.xlu0 %1455
    %vm1458 = vcmask 261312
    %1459 = vst.msk [vmem:[#allocation7] sm:$0xff] %vm1458, %v1456
    %s1460 = scalar_lea.vmem [#allocation7], 8
    %1461 = vst.msk [vmem:[%s1460] sm:$0xff] %vm154, %v1216
    %1463 = vrot.lane.b32.xlu0 %v1290, 8
    %v1464 = vpop.permute.xlu0 %1463
    %1466 = vst.msk [vmem:[%s1460] sm:$0xff] %vm1446, %v1464
    %1468 = vrot.lane.b32.xlu0 %v1364, 16
    %v1469 = vpop.permute.xlu0 %1468
    %1471 = vst.msk [vmem:[%s1460] sm:$0xff] %vm1452, %v1469
    %1473 = vrot.lane.b32.xlu0 %v1438, 24
    %v1474 = vpop.permute.xlu0 %1473
    %1476 = vst.msk [vmem:[%s1460] sm:$0xff] %vm1458, %v1474
    // Predicated region
    $region22: #{tpu_custom_call.1} parent=1 // pred_check
      _
    $region23: #{tpu_custom_call.1} parent=1 // pred_check_branch
      %1478 = sbr.rel (0) target = $region25
    $region24: #{tpu_custom_call.1} parent=1 // pred_region
      %s1480 = ssub.s32 256, 256
      %1481 = vsyncadd [#allocation4], %s1480
      %s1482 = sshll.u32 [#allocation7], 4
      %s1483 = int_to_ptr.vmem [resolvable:$true] %s1482
      %1488 = dma.vmem_to_hbm [thread:$0]  %s1483, 256, %s3, [#allocation4], 128, 128, 8
    $region25: #{tpu_custom_call.1} parent=1 // pred_fallthru
      _
    // Predicated region
    $region26: #{tpu_custom_call.1} parent=1 // pred_check
      _
    $region27: #{tpu_custom_call.1} parent=1 // pred_check_branch
      %1490 = sbr.rel (0) target = $region29
    $region28: #{tpu_custom_call.1} parent=1 // pred_region
      %1491 = dma.done [#allocation4], 256
    $region29: #{tpu_custom_call.1} parent=1 // pred_fallthru
      _
    %1492 = vsyncpa [#allocation3], 1
    %1493 = vsyncpa [#allocation6], 1
    %1494 = vsyncpa [#allocation4], 1

</llo_original>
